<compile_context>
chip_gen: v5e
topology: v5e:2x2
jax: 0.10.0
libtpu: 0.0.40
codegen_flags: <defaults>
</compile_context>

<pallas_src>
import math

import jax
import jax.numpy as jnp
from jax.experimental import pallas as pl
from jax.experimental.pallas import tpu as pltpu

BN_EPS = 1e-5


# ----------------------------------------------------------------------------- config helpers
def calculate_padding(kernel_size, stride):
    # standard "output doubles when stride=2" convention used by such decoders
    return kernel_size - stride


def get_hid_ds(num_layers, start_dim):
    hid_ds = []
    for _ in range(num_layers):
        hid_ds.append(start_dim)
        start_dim *= 2
    hid_ds.reverse()
    return hid_ds


def _round_up(x, m):
    return (x + m - 1) // m * m


def _choose_tile_m(m, k, ocp, max_tile_m):
    """VMEM-budgeted M-tile: double-buffered bf16 patch block + f32 z block per row,
    kept well under the smallest scoped-VMEM default (16 MiB on v5e, 32 MiB v6e/v7x)."""
    per_row = 2 * (2 * k) + 2 * (4 * ocp)
    budget = 6 * 1024 * 1024
    t = min(max_tile_m, max(budget // per_row, 16))
    t = max(16, (t // 16) * 16)
    if m <= t:
        return _round_up(m, 16)
    return t


# ----------------------------------------------------------------------------- Pallas kernels
def _apply_act(x, act):
    if act == "relu":
        return jnp.maximum(x, 0.0)
    if act == "tanh":
        return jnp.tanh(x)
    return x


def _gemm_stats_kernel(tile_m, m_valid, needs_mask):
    """bf16 GEMM (f32 accumulate) + bias -> z tile, plus one-pass BN partial stats
    (sum and sum-of-squares) written to this tile's own stats rows."""
    def kernel(p_ref, w_ref, b_ref, z_ref, s_ref):
        z = jnp.dot(p_ref[...], w_ref[...], preferred_element_type=jnp.float32)
        z = z + b_ref[...][0:1, :]                           # conv-transpose bias
        if needs_mask:                                       # exclude padded M rows
            rows = (pl.program_id(0) * tile_m
                    + jax.lax.broadcasted_iota(jnp.int32, (tile_m, 1), 0))
            zm = jnp.where(rows < m_valid, z, 0.0)
        else:
            zm = z
        s1 = jnp.sum(zm, axis=0, keepdims=True)              # (1, OCp)
        s2 = jnp.sum(zm * zm, axis=0, keepdims=True)         # (1, OCp)
        rid = jax.lax.broadcasted_iota(jnp.int32, (8, 1), 0)
        s_ref[...] = jnp.where(rid == 0, s1, jnp.where(rid == 1, s2, 0.0))
        z_ref[...] = z
    return kernel


def _gemm_act_kernel(act):
    """bf16 GEMM (f32 accumulate) + bias + activation (BN-less end layer)."""
    def kernel(p_ref, w_ref, b_ref, o_ref):
        z = jnp.dot(p_ref[...], w_ref[...], preferred_element_type=jnp.float32)
        z = z + b_ref[...][0:1, :]
        o_ref[...] = _apply_act(z, act)
    return kernel


def _norm_act_kernel(act):
    """Per-channel affine (BN scale/shift packed in rows 0/1) + activation."""
    def kernel(z_ref, a_ref, o_ref):
        a = a_ref[...]
        y = z_ref[...] * a[0:1, :] + a[1:2, :]
        o_ref[...] = _apply_act(y, act)
    return kernel


# ----------------------------------------------------------------------------- fused layer
def _fused_layer(pat, layer, m_valid, max_tile_m):
    """pat: (M, K) bf16 patches -> (M, ncols) f32 activations (BN + act applied)."""
    k = pat.shape[1]
    ocp = layer["ocp"]
    tile_m = _choose_tile_m(m_valid, k, ocp, max_tile_m)
    m_pad = _round_up(m_valid, tile_m)
    if m_pad != m_valid:
        pat = jnp.pad(pat, ((0, m_pad - m_valid), (0, 0)))
    num_tiles = m_pad // tile_m
    parallel = pltpu.CompilerParams(dimension_semantics=("parallel",))

    pat_spec = pl.BlockSpec((tile_m, k), lambda i: (i, 0))
    w_spec = pl.BlockSpec((k, ocp), lambda i: (0, 0))
    par_spec = pl.BlockSpec((8, ocp), lambda i: (0, 0))
    row_spec = pl.BlockSpec((tile_m, ocp), lambda i: (i, 0))

    if not layer["use_bn"]:
        out = pl.pallas_call(
            _gemm_act_kernel(layer["act"]),
            grid=(num_tiles,),
            in_specs=[pat_spec, w_spec, par_spec],
            out_specs=row_spec,
            out_shape=jax.ShapeDtypeStruct((m_pad, ocp), jnp.float32),
            compiler_params=parallel,
        )(pat, layer["wmat"], layer["bias_row"])
        return out[:m_valid, :layer["ncols"]]

    # ---- pass 1: GEMM + bias + per-tile partial BN stats ----
    z, stats = pl.pallas_call(
        _gemm_stats_kernel(tile_m, m_valid, m_pad != m_valid),
        grid=(num_tiles,),
        in_specs=[pat_spec, w_spec, par_spec],
        out_specs=(row_spec, pl.BlockSpec((8, ocp), lambda i: (i, 0))),
        out_shape=(jax.ShapeDtypeStruct((m_pad, ocp), jnp.float32),
                   jax.ShapeDtypeStruct((num_tiles * 8, ocp), jnp.float32)),
        compiler_params=parallel,
    )(pat, layer["wmat"], layer["bias_row"])

    # ---- tiny cross-tile / cross-phase reduction + BN scale/shift (XLA glue) ----
    ncols, cpc, cout = layer["ncols"], layer["cols_per_ch"], layer["cout"]
    part = stats.reshape(num_tiles, 8, ocp)
    s1 = jnp.sum(part[:, 0, :ncols], axis=0).reshape(cpc, cout).sum(axis=0)
    s2 = jnp.sum(part[:, 1, :ncols], axis=0).reshape(cpc, cout).sum(axis=0)
    cnt = float(m_valid * cpc)
    mean = s1 / cnt
    var = jnp.maximum(s2 / cnt - mean * mean, 0.0)           # biased variance, f32
    scale = layer["gamma"] * jax.lax.rsqrt(var + BN_EPS)
    shift = layer["beta"] - mean * scale
    scale_col = jnp.pad(jnp.tile(scale, cpc), (0, ocp - ncols))
    shift_col = jnp.pad(jnp.tile(shift, cpc), (0, ocp - ncols))
    rid = jnp.arange(8)[:, None]
    affine = jnp.where(rid == 0, scale_col[None, :],
                       jnp.where(rid == 1, shift_col[None, :], 0.0))

    # ---- pass 2: normalize + activation ----
    out = pl.pallas_call(
        _norm_act_kernel(layer["act"]),
        grid=(num_tiles,),
        in_specs=[row_spec, par_spec],
        out_specs=row_spec,
        out_shape=jax.ShapeDtypeStruct((m_pad, ocp), jnp.float32),
        compiler_params=parallel,
    )(z, affine)
    return out[:m_valid, :ncols]


# ----------------------------------------------------------------------------- convT lowering
def _convt_apply(x_nhwc, layer, max_tile_m):
    n, h, w, c = x_nhwc.shape
    kh, kw = layer["win"]
    ph, pw = layer["cpad"]
    oh = h + 2 * ph - kh + 1
    ow = w + 2 * pw - kw + 1
    xb = x_nhwc.astype(jnp.bfloat16)
    if kh == 1 and kw == 1 and ph == 0 and pw == 0:
        pat = xb.reshape(n * h * w, c)
    else:
        xp = jnp.pad(xb, ((0, 0), (ph, ph), (pw, pw), (0, 0)))
        # TODO(synk): replace the materialized bf16 input-resolution patch slab
        # with an in-kernel implicit GEMM (shifted-window BlockSpecs) to remove
        # the remaining kh*kw HBM expansion.
        cols = [xp[:, i:i + oh, j:j + ow, :] for i in range(kh) for j in range(kw)]
        pat = jnp.concatenate(cols, axis=-1).reshape(n * oh * ow, kh * kw * c)

    out = _fused_layer(pat, layer, n * oh * ow, max_tile_m)   # (M, ncols) f32
    cout = layer["cout"]
    if layer["kind"] == "phase2":
        # interleave the 4 sub-pixel phases: (pi, pj, oc) columns -> 2x upsample
        out = out.reshape(n, oh, ow, 2, 2, cout)
        out = jnp.transpose(out, (0, 1, 3, 2, 4, 5)).reshape(n, 2 * oh, 2 * ow, cout)
    else:
        out = out.reshape(n, oh, ow, cout)
    return out


def _wmat_stride1(w):
    """PyTorch ConvTranspose2d weight (Cin,Cout,kh,kw), stride 1, padding p ->
    correlation matrix (kh*kw*Cin, Cout) over input padded by (k-1-p), rows
    ordered (ki, kj, ic) to match the patch extraction above."""
    cout = w.shape[1]
    wf = w[:, :, ::-1, ::-1]
    return jnp.transpose(wf, (2, 3, 0, 1)).reshape(-1, cout)


def _wmat_phase2(w):
    """ConvTranspose2d(k=4, s=2, p=1) sub-pixel decomposition: one stride-1
    correlation over 3x3 windows (pad 1) producing all 4 interleaved output
    phases.  out[2y+pi, 2x+pj] uses kernel tap ki = pi - 2a + 3 for window row a."""
    cin, cout = w.shape[0], w.shape[1]
    wb = jnp.zeros((3, 3, cin, 2, 2, cout), w.dtype)
    for pi in range(2):
        for a in range(3):
            ki = pi - 2 * a + 3
            if not 0 <= ki <= 3:
                continue
            for pj in range(2):
                for b in range(3):
                    kj = pj - 2 * b + 3
                    if not 0 <= kj <= 3:
                        continue
                    wb = wb.at[a, b, :, pi, pj, :].set(w[:, :, ki, kj])
    return wb.reshape(9 * cin, 4 * cout)


# ----------------------------------------------------------------------------- FrameDecoder
class FrameDecoderPallas:
    def __init__(self, config, img_size, key, max_tile_m=512):
        self.config = config
        self.max_tile_m = max_tile_m
        kh, kw = config["kernel_size"]
        padding_h = calculate_padding(kh, config["stride"])
        padding_w = calculate_padding(kw, config["stride"])
        up_pad = (padding_h // 2, padding_w // 2)
        self.num_layers = int(math.log2(max(img_size))) - 2
        hid = get_hid_ds(self.num_layers, config["hid_d"])

        keys = iter(jax.random.split(key, 64))

        def make_layer(cin, cout, k_hw, stride, pad, use_bn, act):
            lkh, lkw = k_hw
            bound = 1.0 / math.sqrt(cin * lkh * lkw)
            w = jax.random.uniform(next(keys), (cin, cout, lkh, lkw),
                                   jnp.float32, -bound, bound)
            b = jax.random.uniform(next(keys), (cout,), jnp.float32, -bound, bound)
            if stride == 1:
                wmat = _wmat_stride1(w)
                ncols, cpc = cout, 1
                win = (lkh, lkw)
                cpad = (lkh - 1 - pad[0], lkw - 1 - pad[1])
                kind = "direct"
            elif stride == 2 and (lkh, lkw) == (4, 4) and pad == (1, 1):
                wmat = _wmat_phase2(w)
                ncols, cpc = 4 * cout, 4
                win = (3, 3)
                cpad = (1, 1)
                kind = "phase2"
            else:
                # TODO(synk): general stride/kernel ConvTranspose2d fallback not needed
                # for this module's geometry (stride 1 or k=2s, p=s//... ).
                raise NotImplementedError("unsupported ConvTranspose2d geometry")
            ocp = _round_up(ncols, 128)                       # lane-dense output columns
            wmat = jnp.pad(wmat, ((0, 0), (0, ocp - ncols))).astype(jnp.bfloat16)
            bias_col = jnp.pad(jnp.tile(b, cpc), (0, ocp - ncols))
            bias_row = jnp.zeros((8, ocp), jnp.float32).at[0, :].set(bias_col)
            return dict(wmat=wmat, bias_row=bias_row,
                        gamma=jnp.ones((cout,), jnp.float32),
                        beta=jnp.zeros((cout,), jnp.float32),
                        ncols=ncols, cols_per_ch=cpc, cout=cout, ocp=ocp,
                        win=win, cpad=cpad, kind=kind, use_bn=use_bn, act=act)

        self.start = make_layer(config["in_d"], hid[0], (kh, kw), 1, (0, 0),
                                True, "relu")
        self.pre, self.ups = [], []
        for i in range(self.num_layers - 1):
            self.pre.append(make_layer(hid[i] + hid[i], hid[i], (3, 3), 1, (1, 1),
                                       True, "relu"))
            self.ups.append(make_layer(hid[i], hid[i + 1], (kh, kw),
                                       config["stride"], up_pad, True, "relu"))
        self.end = make_layer(hid[-1], 3, (1, 1), 1, (0, 0), False, "tanh")

    def __call__(self, x, img_latents):
        # mimic PyTorch forward: img_latents.pop(); img_latents.reverse()
        lat = list(img_latents)
        lat.pop()
        lat.reverse()

        n = x.shape[0]
        h = x.reshape(n, 1, 1, self.config["in_d"])           # x.view(N,in_d,1,1) in NHWC
        h = _convt_apply(h, self.start, self.max_tile_m)
        for i in range(self.num_layers - 1):
            li = jnp.transpose(lat[i], (0, 2, 3, 1))           # NCHW latent -> NHWC
            h = jnp.concatenate([h, li], axis=-1)              # cat on channels
            h = _convt_apply(h, self.pre[i], self.max_tile_m)
            h = _convt_apply(h, self.ups[i], self.max_tile_m)
        h = _convt_apply(h, self.end, self.max_tile_m)
        return jnp.transpose(h, (0, 3, 1, 2))                  # back to NCHW


# ----------------------------------------------------------------------------- demo
if __name__ == "__main__":
    config = {"in_d": 8, "hid_d": 4, "kernel_size": (4, 4), "stride": 2}
    img_size = (32, 32)               # -> num_layers = 3, hid_ds = [16, 8, 4]

    key = jax.random.PRNGKey(0)
    kx, k1, k2, k3, kp = jax.random.split(key, 5)

    B = 2
    x = jax.random.normal(kx, (B, config["in_d"]), jnp.float32)
    # encoder latents (NCHW, PyTorch convention); last one gets popped & unused
    img_latents = [
        jax.random.normal(k1, (B, 8, 8, 8), jnp.float32),      # used at i=1
        jax.random.normal(k2, (B, 16, 4, 4), jnp.float32),     # used at i=0
        jax.random.normal(k3, (B, 4, 16, 16), jnp.float32),    # popped
    ]

    # max_tile_m=64 so the demo also exercises the multi-tile grid and the
    # cross-tile BN-stat reduction; real workloads use the default VMEM-budgeted tile.
    model = FrameDecoderPallas(config, img_size, kp, max_tile_m=64)
    fwd = jax.jit(model.__call__)
    out = jax.block_until_ready(fwd(x, img_latents))

    assert out.shape == (B, 3, 16, 16), out.shape
    assert bool(jnp.all(jnp.isfinite(out)))
    assert bool(jnp.all(jnp.abs(out) <= 1.0 + 1e-6))           # tanh range
    print("KERNEL_OK")
</pallas_src>

<mosaic_0001>
module attributes {stable_mosaic.version = 11 : i64} {
  func.func @kernel(%arg0: i32, %arg1: memref<32x128xf32, #tpu.memory_space<vmem>>, %arg2: memref<8x128xf32, #tpu.memory_space<vmem>>, %arg3: memref<32x128xf32, #tpu.memory_space<vmem>>) attributes {dimension_semantics = [#tpu.dimension_semantics<parallel>], iteration_bounds = array<i64: 1>, scalar_prefetch = 0 : i64, scratch_operands = 0 : i64, tpu.core_type = #tpu.core_type<tc>, window_params = [{transform_indices = @transform_0, window_bounds = array<i64: 32, 128>}, {pipeline_mode = #tpu.pipeline_mode<synchronous>, transform_indices = @transform_1, window_bounds = array<i64: 8, 128>}, {transform_indices = @transform_2, window_bounds = array<i64: 32, 128>}]} {
    %c0 = arith.constant 0 : index
    %c0_0 = arith.constant 0 : index
    %0 = vector.load %arg2[%c0, %c0_0] : memref<8x128xf32, #tpu.memory_space<vmem>>, vector<8x128xf32>
    %c0_1 = arith.constant 0 : index
    %c0_2 = arith.constant 0 : index
    %1 = vector.load %arg1[%c0_1, %c0_2] : memref<32x128xf32, #tpu.memory_space<vmem>>, vector<32x128xf32>
    %2 = vector.extract_strided_slice %0 {offsets = [0, 0], sizes = [1, 128], strides = [1, 1]} : vector<8x128xf32> to vector<1x128xf32>
    %3 = vector.broadcast %2 : vector<1x128xf32> to vector<32x128xf32>
    %4 = arith.mulf %1, %3 : vector<32x128xf32>
    %5 = vector.extract_strided_slice %0 {offsets = [1, 0], sizes = [1, 128], strides = [1, 1]} : vector<8x128xf32> to vector<1x128xf32>
    %6 = vector.broadcast %5 : vector<1x128xf32> to vector<32x128xf32>
    %7 = arith.addf %4, %6 : vector<32x128xf32>
    %cst = arith.constant 0.000000e+00 : f32
    %8 = vector.broadcast %cst : f32 to vector<32x128xf32>
    %9 = arith.maximumf %7, %8 : vector<32x128xf32>
    %c0_3 = arith.constant 0 : index
    %c0_4 = arith.constant 0 : index
    %10 = vector.load %arg3[%c0_3, %c0_4] : memref<32x128xf32, #tpu.memory_space<vmem>>, vector<32x128xf32>
    tpu.vector_store %arg3[%c0_3, %c0_4], %9 {strides = array<i32>} : memref<32x128xf32, #tpu.memory_space<vmem>>, vector<32x128xf32>,
    return
  }
  func.func @transform_0(%arg0: i32) -> (i32, i32) {
    %c0_i32 = arith.constant 0 : i32
    %c0_i32_0 = arith.constant 0 : i32
    return %arg0, %c0_i32 : i32, i32
  }
  func.func @transform_1(%arg0: i32) -> (i32, i32) {
    %c0_i32 = arith.constant 0 : i32
    %c0_i32_0 = arith.constant 0 : i32
    %c0_i32_1 = arith.constant 0 : i32
    return %c0_i32, %c0_i32_0 : i32, i32
  }
  func.func @transform_2(%arg0: i32) -> (i32, i32) {
    %c0_i32 = arith.constant 0 : i32
    %c0_i32_0 = arith.constant 0 : i32
    return %arg0, %c0_i32 : i32, i32
  }
}

module attributes {stable_mosaic.version = 11 : i64} {
  func.func @kernel(%arg0: i32, %arg1: memref<32x128xbf16, #tpu.memory_space<vmem>>, %arg2: memref<128x128xbf16, #tpu.memory_space<vmem>>, %arg3: memref<8x128xf32, #tpu.memory_space<vmem>>, %arg4: memref<32x128xf32, #tpu.memory_space<vmem>>, %arg5: memref<8x128xf32, #tpu.memory_space<vmem>>) attributes {dimension_semantics = [#tpu.dimension_semantics<parallel>], iteration_bounds = array<i64: 1>, scalar_prefetch = 0 : i64, scratch_operands = 0 : i64, tpu.core_type = #tpu.core_type<tc>, window_params = [{transform_indices = @transform_0, window_bounds = array<i64: 32, 128>}, {pipeline_mode = #tpu.pipeline_mode<synchronous>, transform_indices = @transform_1, window_bounds = array<i64: 128, 128>}, {pipeline_mode = #tpu.pipeline_mode<synchronous>, transform_indices = @transform_2, window_bounds = array<i64: 8, 128>}, {transform_indices = @transform_3, window_bounds = array<i64: 32, 128>}, {transform_indices = @transform_4, window_bounds = array<i64: 8, 128>}]} {
    %c0 = arith.constant 0 : index
    %c0_0 = arith.constant 0 : index
    %0 = vector.load %arg1[%c0, %c0_0] : memref<32x128xbf16, #tpu.memory_space<vmem>>, vector<32x128xbf16>
    %c0_1 = arith.constant 0 : index
    %c0_2 = arith.constant 0 : index
    %1 = vector.load %arg2[%c0_1, %c0_2] : memref<128x128xbf16, #tpu.memory_space<vmem>>, vector<128x128xbf16>
    %cst = arith.constant dense<0.000000e+00> : vector<32x128xf32>
    %2 = tpu.matmul %0, %1, %cst {dimension_numbers = #tpu.dot_dimension_numbers<[1], [0], [0], [1], [0, 0, 1, 1], [], []>} : vector<32x128xbf16>, vector<128x128xbf16>, vector<32x128xf32> -> vector<32x128xf32>
    %c0_3 = arith.constant 0 : index
    %c0_4 = arith.constant 0 : index
    %3 = vector.load %arg3[%c0_3, %c0_4] : memref<8x128xf32, #tpu.memory_space<vmem>>, vector<8x128xf32>
    %4 = vector.extract_strided_slice %3 {offsets = [0, 0], sizes = [1, 128], strides = [1, 1]} : vector<8x128xf32> to vector<1x128xf32>
    %5 = vector.broadcast %4 : vector<1x128xf32> to vector<32x128xf32>
    %6 = arith.addf %2, %5 : vector<32x128xf32>
    %cst_5 = arith.constant dense<0.000000e+00> : vector<128xf32>
    %7 = vector.multi_reduction <add>, %6, %cst_5 [0] : vector<32x128xf32> to vector<128xf32>
    %8 = vector.shape_cast %7 : vector<128xf32> to vector<1x128xf32>
    %9 = arith.mulf %6, %6 : vector<32x128xf32>
    %cst_6 = arith.constant dense<0.000000e+00> : vector<128xf32>
    %10 = vector.multi_reduction <add>, %9, %cst_6 [0] : vector<32x128xf32> to vector<128xf32>
    %11 = vector.shape_cast %10 : vector<128xf32> to vector<1x128xf32>
    %12 = tpu.iota {dimensions = array<i32: 0>} : vector<8x1xi32>
    %c0_i32 = arith.constant 0 : i32
    %13 = vector.broadcast %c0_i32 : i32 to vector<8x1xi32>
    %14 = arith.cmpi eq, %12, %13 : vector<8x1xi32>
    %c1_i32 = arith.constant 1 : i32
    %15 = vector.broadcast %c1_i32 : i32 to vector<8x1xi32>
    %16 = arith.cmpi eq, %12, %15 : vector<8x1xi32>
    %cst_7 = arith.constant 0.000000e+00 : f32
    %17 = vector.shape_cast %16 : vector<8x1xi1> to vector<8x1xi1>
    %18 = vector.broadcast %17 : vector<8x1xi1> to vector<8x128xi1>
    %19 = vector.shape_cast %11 : vector<1x128xf32> to vector<1x128xf32>
    %20 = vector.broadcast %19 : vector<1x128xf32> to vector<8x128xf32>
    %21 = vector.broadcast %cst_7 : f32 to vector<8x128xf32>
    %22 = arith.select %18, %20, %21 : vector<8x128xi1>, vector<8x128xf32>
    %23 = vector.shape_cast %14 : vector<8x1xi1> to vector<8x1xi1>
    %24 = vector.broadcast %23 : vector<8x1xi1> to vector<8x128xi1>
    %25 = vector.shape_cast %8 : vector<1x128xf32> to vector<1x128xf32>
    %26 = vector.broadcast %25 : vector<1x128xf32> to vector<8x128xf32>
    %27 = arith.select %24, %26, %22 : vector<8x128xi1>, vector<8x128xf32>
    %c0_8 = arith.constant 0 : index
    %c0_9 = arith.constant 0 : index
    %28 = vector.load %arg5[%c0_8, %c0_9] : memref<8x128xf32, #tpu.memory_space<vmem>>, vector<8x128xf32>
    tpu.vector_store %arg5[%c0_8, %c0_9], %27 {strides = array<i32>} : memref<8x128xf32, #tpu.memory_space<vmem>>, vector<8x128xf32>,
    %c0_10 = arith.constant 0 : index
    %c0_11 = arith.constant 0 : index
    %29 = vector.load %arg4[%c0_10, %c0_11] : memref<32x128xf32, #tpu.memory_space<vmem>>, vector<32x128xf32>
    tpu.vector_store %arg4[%c0_10, %c0_11], %6 {strides = array<i32>} : memref<32x128xf32, #tpu.memory_space<vmem>>, vector<32x128xf32>,
    return
  }
  func.func @transform_0(%arg0: i32) -> (i32, i32) {
    %c0_i32 = arith.constant 0 : i32
    %c0_i32_0 = arith.constant 0 : i32
    return %arg0, %c0_i32 : i32, i32
  }
  func.func @transform_1(%arg0: i32) -> (i32, i32) {
    %c0_i32 = arith.constant 0 : i32
    %c0_i32_0 = arith.constant 0 : i32
    %c0_i32_1 = arith.constant 0 : i32
    return %c0_i32, %c0_i32_0 : i32, i32
  }
  func.func @transform_2(%arg0: i32) -> (i32, i32) {
    %c0_i32 = arith.constant 0 : i32
    %c0_i32_0 = arith.constant 0 : i32
    %c0_i32_1 = arith.constant 0 : i32
    return %c0_i32, %c0_i32_0 : i32, i32
  }
  func.func @transform_3(%arg0: i32) -> (i32, i32) {
    %c0_i32 = arith.constant 0 : i32
    %c0_i32_0 = arith.constant 0 : i32
    return %arg0, %c0_i32 : i32, i32
  }
  func.func @transform_4(%arg0: i32) -> (i32, i32) {
    %c0_i32 = arith.constant 0 : i32
    %c0_i32_0 = arith.constant 0 : i32
    return %arg0, %c0_i32 : i32, i32
  }
}

module attributes {stable_mosaic.version = 11 : i64} {
  func.func @kernel(%arg0: i32, %arg1: memref<32x288xbf16, #tpu.memory_space<vmem>>, %arg2: memref<288x128xbf16, #tpu.memory_space<vmem>>, %arg3: memref<8x128xf32, #tpu.memory_space<vmem>>, %arg4: memref<32x128xf32, #tpu.memory_space<vmem>>, %arg5: memref<8x128xf32, #tpu.memory_space<vmem>>) attributes {dimension_semantics = [#tpu.dimension_semantics<parallel>], iteration_bounds = array<i64: 1>, scalar_prefetch = 0 : i64, scratch_operands = 0 : i64, tpu.core_type = #tpu.core_type<tc>, window_params = [{transform_indices = @transform_0, window_bounds = array<i64: 32, 288>}, {pipeline_mode = #tpu.pipeline_mode<synchronous>, transform_indices = @transform_1, window_bounds = array<i64: 288, 128>}, {pipeline_mode = #tpu.pipeline_mode<synchronous>, transform_indices = @transform_2, window_bounds = array<i64: 8, 128>}, {transform_indices = @transform_3, window_bounds = array<i64: 32, 128>}, {transform_indices = @transform_4, window_bounds = array<i64: 8, 128>}]} {
    %c0 = arith.constant 0 : index
    %c0_0 = arith.constant 0 : index
    %0 = vector.load %arg1[%c0, %c0_0] : memref<32x288xbf16, #tpu.memory_space<vmem>>, vector<32x288xbf16>
    %c0_1 = arith.constant 0 : index
    %c0_2 = arith.constant 0 : index
    %1 = vector.load %arg2[%c0_1, %c0_2] : memref<288x128xbf16, #tpu.memory_space<vmem>>, vector<288x128xbf16>
    %cst = arith.constant dense<0.000000e+00> : vector<32x128xf32>
    %2 = tpu.matmul %0, %1, %cst {dimension_numbers = #tpu.dot_dimension_numbers<[1], [0], [0], [1], [0, 0, 1, 1], [], []>} : vector<32x288xbf16>, vector<288x128xbf16>, vector<32x128xf32> -> vector<32x128xf32>
    %c0_3 = arith.constant 0 : index
    %c0_4 = arith.constant 0 : index
    %3 = vector.load %arg3[%c0_3, %c0_4] : memref<8x128xf32, #tpu.memory_space<vmem>>, vector<8x128xf32>
    %4 = vector.extract_strided_slice %3 {offsets = [0, 0], sizes = [1, 128], strides = [1, 1]} : vector<8x128xf32> to vector<1x128xf32>
    %5 = vector.broadcast %4 : vector<1x128xf32> to vector<32x128xf32>
    %6 = arith.addf %2, %5 : vector<32x128xf32>
    %cst_5 = arith.constant dense<0.000000e+00> : vector<128xf32>
    %7 = vector.multi_reduction <add>, %6, %cst_5 [0] : vector<32x128xf32> to vector<128xf32>
    %8 = vector.shape_cast %7 : vector<128xf32> to vector<1x128xf32>
    %9 = arith.mulf %6, %6 : vector<32x128xf32>
    %cst_6 = arith.constant dense<0.000000e+00> : vector<128xf32>
    %10 = vector.multi_reduction <add>, %9, %cst_6 [0] : vector<32x128xf32> to vector<128xf32>
    %11 = vector.shape_cast %10 : vector<128xf32> to vector<1x128xf32>
    %12 = tpu.iota {dimensions = array<i32: 0>} : vector<8x1xi32>
    %c0_i32 = arith.constant 0 : i32
    %13 = vector.broadcast %c0_i32 : i32 to vector<8x1xi32>
    %14 = arith.cmpi eq, %12, %13 : vector<8x1xi32>
    %c1_i32 = arith.constant 1 : i32
    %15 = vector.broadcast %c1_i32 : i32 to vector<8x1xi32>
    %16 = arith.cmpi eq, %12, %15 : vector<8x1xi32>
    %cst_7 = arith.constant 0.000000e+00 : f32
    %17 = vector.shape_cast %16 : vector<8x1xi1> to vector<8x1xi1>
    %18 = vector.broadcast %17 : vector<8x1xi1> to vector<8x128xi1>
    %19 = vector.shape_cast %11 : vector<1x128xf32> to vector<1x128xf32>
    %20 = vector.broadcast %19 : vector<1x128xf32> to vector<8x128xf32>
    %21 = vector.broadcast %cst_7 : f32 to vector<8x128xf32>
    %22 = arith.select %18, %20, %21 : vector<8x128xi1>, vector<8x128xf32>
    %23 = vector.shape_cast %14 : vector<8x1xi1> to vector<8x1xi1>
    %24 = vector.broadcast %23 : vector<8x1xi1> to vector<8x128xi1>
    %25 = vector.shape_cast %8 : vector<1x128xf32> to vector<1x128xf32>
    %26 = vector.broadcast %25 : vector<1x128xf32> to vector<8x128xf32>
    %27 = arith.select %24, %26, %22 : vector<8x128xi1>, vector<8x128xf32>
    %c0_8 = arith.constant 0 : index
    %c0_9 = arith.constant 0 : index
    %28 = vector.load %arg5[%c0_8, %c0_9] : memref<8x128xf32, #tpu.memory_space<vmem>>, vector<8x128xf32>
    tpu.vector_store %arg5[%c0_8, %c0_9], %27 {strides = array<i32>} : memref<8x128xf32, #tpu.memory_space<vmem>>, vector<8x128xf32>,
    %c0_10 = arith.constant 0 : index
    %c0_11 = arith.constant 0 : index
    %29 = vector.load %arg4[%c0_10, %c0_11] : memref<32x128xf32, #tpu.memory_space<vmem>>, vector<32x128xf32>
    tpu.vector_store %arg4[%c0_10, %c0_11], %6 {strides = array<i32>} : memref<32x128xf32, #tpu.memory_space<vmem>>, vector<32x128xf32>,
    return
  }
  func.func @transform_0(%arg0: i32) -> (i32, i32) {
    %c0_i32 = arith.constant 0 : i32
    %c0_i32_0 = arith.constant 0 : i32
    return %arg0, %c0_i32 : i32, i32
  }
  func.func @transform_1(%arg0: i32) -> (i32, i32) {
    %c0_i32 = arith.constant 0 : i32
    %c0_i32_0 = arith.constant 0 : i32
    %c0_i32_1 = arith.constant 0 : i32
    return %c0_i32, %c0_i32_0 : i32, i32
  }
  func.func @transform_2(%arg0: i32) -> (i32, i32) {
    %c0_i32 = arith.constant 0 : i32
    %c0_i32_0 = arith.constant 0 : i32
    %c0_i32_1 = arith.constant 0 : i32
    return %c0_i32, %c0_i32_0 : i32, i32
  }
  func.func @transform_3(%arg0: i32) -> (i32, i32) {
    %c0_i32 = arith.constant 0 : i32
    %c0_i32_0 = arith.constant 0 : i32
    return %arg0, %c0_i32 : i32, i32
  }
  func.func @transform_4(%arg0: i32) -> (i32, i32) {
    %c0_i32 = arith.constant 0 : i32
    %c0_i32_0 = arith.constant 0 : i32
    return %arg0, %c0_i32 : i32, i32
  }
}

module attributes {stable_mosaic.version = 11 : i64} {
  func.func @kernel(%arg0: i32, %arg1: memref<32x144xbf16, #tpu.memory_space<vmem>>, %arg2: memref<144x128xbf16, #tpu.memory_space<vmem>>, %arg3: memref<8x128xf32, #tpu.memory_space<vmem>>, %arg4: memref<32x128xf32, #tpu.memory_space<vmem>>, %arg5: memref<8x128xf32, #tpu.memory_space<vmem>>) attributes {dimension_semantics = [#tpu.dimension_semantics<parallel>], iteration_bounds = array<i64: 1>, scalar_prefetch = 0 : i64, scratch_operands = 0 : i64, tpu.core_type = #tpu.core_type<tc>, window_params = [{transform_indices = @transform_0, window_bounds = array<i64: 32, 144>}, {pipeline_mode = #tpu.pipeline_mode<synchronous>, transform_indices = @transform_1, window_bounds = array<i64: 144, 128>}, {pipeline_mode = #tpu.pipeline_mode<synchronous>, transform_indices = @transform_2, window_bounds = array<i64: 8, 128>}, {transform_indices = @transform_3, window_bounds = array<i64: 32, 128>}, {transform_indices = @transform_4, window_bounds = array<i64: 8, 128>}]} {
    %c0 = arith.constant 0 : index
    %c0_0 = arith.constant 0 : index
    %0 = vector.load %arg1[%c0, %c0_0] : memref<32x144xbf16, #tpu.memory_space<vmem>>, vector<32x144xbf16>
    %c0_1 = arith.constant 0 : index
    %c0_2 = arith.constant 0 : index
    %1 = vector.load %arg2[%c0_1, %c0_2] : memref<144x128xbf16, #tpu.memory_space<vmem>>, vector<144x128xbf16>
    %cst = arith.constant dense<0.000000e+00> : vector<32x128xf32>
    %2 = tpu.matmul %0, %1, %cst {dimension_numbers = #tpu.dot_dimension_numbers<[1], [0], [0], [1], [0, 0, 1, 1], [], []>} : vector<32x144xbf16>, vector<144x128xbf16>, vector<32x128xf32> -> vector<32x128xf32>
    %c0_3 = arith.constant 0 : index
    %c0_4 = arith.constant 0 : index
    %3 = vector.load %arg3[%c0_3, %c0_4] : memref<8x128xf32, #tpu.memory_space<vmem>>, vector<8x128xf32>
    %4 = vector.extract_strided_slice %3 {offsets = [0, 0], sizes = [1, 128], strides = [1, 1]} : vector<8x128xf32> to vector<1x128xf32>
    %5 = vector.broadcast %4 : vector<1x128xf32> to vector<32x128xf32>
    %6 = arith.addf %2, %5 : vector<32x128xf32>
    %cst_5 = arith.constant dense<0.000000e+00> : vector<128xf32>
    %7 = vector.multi_reduction <add>, %6, %cst_5 [0] : vector<32x128xf32> to vector<128xf32>
    %8 = vector.shape_cast %7 : vector<128xf32> to vector<1x128xf32>
    %9 = arith.mulf %6, %6 : vector<32x128xf32>
    %cst_6 = arith.constant dense<0.000000e+00> : vector<128xf32>
    %10 = vector.multi_reduction <add>, %9, %cst_6 [0] : vector<32x128xf32> to vector<128xf32>
    %11 = vector.shape_cast %10 : vector<128xf32> to vector<1x128xf32>
    %12 = tpu.iota {dimensions = array<i32: 0>} : vector<8x1xi32>
    %c0_i32 = arith.constant 0 : i32
    %13 = vector.broadcast %c0_i32 : i32 to vector<8x1xi32>
    %14 = arith.cmpi eq, %12, %13 : vector<8x1xi32>
    %c1_i32 = arith.constant 1 : i32
    %15 = vector.broadcast %c1_i32 : i32 to vector<8x1xi32>
    %16 = arith.cmpi eq, %12, %15 : vector<8x1xi32>
    %cst_7 = arith.constant 0.000000e+00 : f32
    %17 = vector.shape_cast %16 : vector<8x1xi1> to vector<8x1xi1>
    %18 = vector.broadcast %17 : vector<8x1xi1> to vector<8x128xi1>
    %19 = vector.shape_cast %11 : vector<1x128xf32> to vector<1x128xf32>
    %20 = vector.broadcast %19 : vector<1x128xf32> to vector<8x128xf32>
    %21 = vector.broadcast %cst_7 : f32 to vector<8x128xf32>
    %22 = arith.select %18, %20, %21 : vector<8x128xi1>, vector<8x128xf32>
    %23 = vector.shape_cast %14 : vector<8x1xi1> to vector<8x1xi1>
    %24 = vector.broadcast %23 : vector<8x1xi1> to vector<8x128xi1>
    %25 = vector.shape_cast %8 : vector<1x128xf32> to vector<1x128xf32>
    %26 = vector.broadcast %25 : vector<1x128xf32> to vector<8x128xf32>
    %27 = arith.select %24, %26, %22 : vector<8x128xi1>, vector<8x128xf32>
    %c0_8 = arith.constant 0 : index
    %c0_9 = arith.constant 0 : index
    %28 = vector.load %arg5[%c0_8, %c0_9] : memref<8x128xf32, #tpu.memory_space<vmem>>, vector<8x128xf32>
    tpu.vector_store %arg5[%c0_8, %c0_9], %27 {strides = array<i32>} : memref<8x128xf32, #tpu.memory_space<vmem>>, vector<8x128xf32>,
    %c0_10 = arith.constant 0 : index
    %c0_11 = arith.constant 0 : index
    %29 = vector.load %arg4[%c0_10, %c0_11] : memref<32x128xf32, #tpu.memory_space<vmem>>, vector<32x128xf32>
    tpu.vector_store %arg4[%c0_10, %c0_11], %6 {strides = array<i32>} : memref<32x128xf32, #tpu.memory_space<vmem>>, vector<32x128xf32>,
    return
  }
  func.func @transform_0(%arg0: i32) -> (i32, i32) {
    %c0_i32 = arith.constant 0 : i32
    %c0_i32_0 = arith.constant 0 : i32
    return %arg0, %c0_i32 : i32, i32
  }
  func.func @transform_1(%arg0: i32) -> (i32, i32) {
    %c0_i32 = arith.constant 0 : i32
    %c0_i32_0 = arith.constant 0 : i32
    %c0_i32_1 = arith.constant 0 : i32
    return %c0_i32, %c0_i32_0 : i32, i32
  }
  func.func @transform_2(%arg0: i32) -> (i32, i32) {
    %c0_i32 = arith.constant 0 : i32
    %c0_i32_0 = arith.constant 0 : i32
    %c0_i32_1 = arith.constant 0 : i32
    return %c0_i32, %c0_i32_0 : i32, i32
  }
  func.func @transform_3(%arg0: i32) -> (i32, i32) {
    %c0_i32 = arith.constant 0 : i32
    %c0_i32_0 = arith.constant 0 : i32
    return %arg0, %c0_i32 : i32, i32
  }
  func.func @transform_4(%arg0: i32) -> (i32, i32) {
    %c0_i32 = arith.constant 0 : i32
    %c0_i32_0 = arith.constant 0 : i32
    return %arg0, %c0_i32 : i32, i32
  }
}

module attributes {stable_mosaic.version = 11 : i64} {
  func.func @kernel(%arg0: i32, %arg1: memref<64x144xbf16, #tpu.memory_space<vmem>>, %arg2: memref<144x128xbf16, #tpu.memory_space<vmem>>, %arg3: memref<8x128xf32, #tpu.memory_space<vmem>>, %arg4: memref<64x128xf32, #tpu.memory_space<vmem>>, %arg5: memref<8x128xf32, #tpu.memory_space<vmem>>) attributes {dimension_semantics = [#tpu.dimension_semantics<parallel>], iteration_bounds = array<i64: 2>, scalar_prefetch = 0 : i64, scratch_operands = 0 : i64, tpu.core_type = #tpu.core_type<tc>, window_params = [{transform_indices = @transform_0, window_bounds = array<i64: 64, 144>}, {pipeline_mode = #tpu.pipeline_mode<synchronous>, transform_indices = @transform_1, window_bounds = array<i64: 144, 128>}, {pipeline_mode = #tpu.pipeline_mode<synchronous>, transform_indices = @transform_2, window_bounds = array<i64: 8, 128>}, {transform_indices = @transform_3, window_bounds = array<i64: 64, 128>}, {transform_indices = @transform_4, window_bounds = array<i64: 8, 128>}]} {
    %c0 = arith.constant 0 : index
    %c0_0 = arith.constant 0 : index
    %0 = vector.load %arg1[%c0, %c0_0] : memref<64x144xbf16, #tpu.memory_space<vmem>>, vector<64x144xbf16>
    %c0_1 = arith.constant 0 : index
    %c0_2 = arith.constant 0 : index
    %1 = vector.load %arg2[%c0_1, %c0_2] : memref<144x128xbf16, #tpu.memory_space<vmem>>, vector<144x128xbf16>
    %cst = arith.constant dense<0.000000e+00> : vector<64x128xf32>
    %2 = tpu.matmul %0, %1, %cst {dimension_numbers = #tpu.dot_dimension_numbers<[1], [0], [0], [1], [0, 0, 1, 1], [], []>} : vector<64x144xbf16>, vector<144x128xbf16>, vector<64x128xf32> -> vector<64x128xf32>
    %c0_3 = arith.constant 0 : index
    %c0_4 = arith.constant 0 : index
    %3 = vector.load %arg3[%c0_3, %c0_4] : memref<8x128xf32, #tpu.memory_space<vmem>>, vector<8x128xf32>
    %4 = vector.extract_strided_slice %3 {offsets = [0, 0], sizes = [1, 128], strides = [1, 1]} : vector<8x128xf32> to vector<1x128xf32>
    %5 = vector.broadcast %4 : vector<1x128xf32> to vector<64x128xf32>
    %6 = arith.addf %2, %5 : vector<64x128xf32>
    %cst_5 = arith.constant dense<0.000000e+00> : vector<128xf32>
    %7 = vector.multi_reduction <add>, %6, %cst_5 [0] : vector<64x128xf32> to vector<128xf32>
    %8 = vector.shape_cast %7 : vector<128xf32> to vector<1x128xf32>
    %9 = arith.mulf %6, %6 : vector<64x128xf32>
    %cst_6 = arith.constant dense<0.000000e+00> : vector<128xf32>
    %10 = vector.multi_reduction <add>, %9, %cst_6 [0] : vector<64x128xf32> to vector<128xf32>
    %11 = vector.shape_cast %10 : vector<128xf32> to vector<1x128xf32>
    %12 = tpu.iota {dimensions = array<i32: 0>} : vector<8x1xi32>
    %c0_i32 = arith.constant 0 : i32
    %13 = vector.broadcast %c0_i32 : i32 to vector<8x1xi32>
    %14 = arith.cmpi eq, %12, %13 : vector<8x1xi32>
    %c1_i32 = arith.constant 1 : i32
    %15 = vector.broadcast %c1_i32 : i32 to vector<8x1xi32>
    %16 = arith.cmpi eq, %12, %15 : vector<8x1xi32>
    %cst_7 = arith.constant 0.000000e+00 : f32
    %17 = vector.shape_cast %16 : vector<8x1xi1> to vector<8x1xi1>
    %18 = vector.broadcast %17 : vector<8x1xi1> to vector<8x128xi1>
    %19 = vector.shape_cast %11 : vector<1x128xf32> to vector<1x128xf32>
    %20 = vector.broadcast %19 : vector<1x128xf32> to vector<8x128xf32>
    %21 = vector.broadcast %cst_7 : f32 to vector<8x128xf32>
    %22 = arith.select %18, %20, %21 : vector<8x128xi1>, vector<8x128xf32>
    %23 = vector.shape_cast %14 : vector<8x1xi1> to vector<8x1xi1>
    %24 = vector.broadcast %23 : vector<8x1xi1> to vector<8x128xi1>
    %25 = vector.shape_cast %8 : vector<1x128xf32> to vector<1x128xf32>
    %26 = vector.broadcast %25 : vector<1x128xf32> to vector<8x128xf32>
    %27 = arith.select %24, %26, %22 : vector<8x128xi1>, vector<8x128xf32>
    %c0_8 = arith.constant 0 : index
    %c0_9 = arith.constant 0 : index
    %28 = vector.load %arg5[%c0_8, %c0_9] : memref<8x128xf32, #tpu.memory_space<vmem>>, vector<8x128xf32>
    tpu.vector_store %arg5[%c0_8, %c0_9], %27 {strides = array<i32>} : memref<8x128xf32, #tpu.memory_space<vmem>>, vector<8x128xf32>,
    %c0_10 = arith.constant 0 : index
    %c0_11 = arith.constant 0 : index
    %29 = vector.load %arg4[%c0_10, %c0_11] : memref<64x128xf32, #tpu.memory_space<vmem>>, vector<64x128xf32>
    tpu.vector_store %arg4[%c0_10, %c0_11], %6 {strides = array<i32>} : memref<64x128xf32, #tpu.memory_space<vmem>>, vector<64x128xf32>,
    return
  }
  func.func @transform_0(%arg0: i32) -> (i32, i32) {
    %c0_i32 = arith.constant 0 : i32
    %c0_i32_0 = arith.constant 0 : i32
    return %arg0, %c0_i32 : i32, i32
  }
  func.func @transform_1(%arg0: i32) -> (i32, i32) {
    %c0_i32 = arith.constant 0 : i32
    %c0_i32_0 = arith.constant 0 : i32
    %c0_i32_1 = arith.constant 0 : i32
    return %c0_i32, %c0_i32_0 : i32, i32
  }
  func.func @transform_2(%arg0: i32) -> (i32, i32) {
    %c0_i32 = arith.constant 0 : i32
    %c0_i32_0 = arith.constant 0 : i32
    %c0_i32_1 = arith.constant 0 : i32
    return %c0_i32, %c0_i32_0 : i32, i32
  }
  func.func @transform_3(%arg0: i32) -> (i32, i32) {
    %c0_i32 = arith.constant 0 : i32
    %c0_i32_0 = arith.constant 0 : i32
    return %arg0, %c0_i32 : i32, i32
  }
  func.func @transform_4(%arg0: i32) -> (i32, i32) {
    %c0_i32 = arith.constant 0 : i32
    %c0_i32_0 = arith.constant 0 : i32
    return %arg0, %c0_i32 : i32, i32
  }
}

module attributes {stable_mosaic.version = 11 : i64} {
  func.func @kernel(%arg0: i32, %arg1: memref<64x128xf32, #tpu.memory_space<vmem>>, %arg2: memref<8x128xf32, #tpu.memory_space<vmem>>, %arg3: memref<64x128xf32, #tpu.memory_space<vmem>>) attributes {dimension_semantics = [#tpu.dimension_semantics<parallel>], iteration_bounds = array<i64: 2>, scalar_prefetch = 0 : i64, scratch_operands = 0 : i64, tpu.core_type = #tpu.core_type<tc>, window_params = [{transform_indices = @transform_0, window_bounds = array<i64: 64, 128>}, {pipeline_mode = #tpu.pipeline_mode<synchronous>, transform_indices = @transform_1, window_bounds = array<i64: 8, 128>}, {transform_indices = @transform_2, window_bounds = array<i64: 64, 128>}]} {
    %c0 = arith.constant 0 : index
    %c0_0 = arith.constant 0 : index
    %0 = vector.load %arg2[%c0, %c0_0] : memref<8x128xf32, #tpu.memory_space<vmem>>, vector<8x128xf32>
    %c0_1 = arith.constant 0 : index
    %c0_2 = arith.constant 0 : index
    %1 = vector.load %arg1[%c0_1, %c0_2] : memref<64x128xf32, #tpu.memory_space<vmem>>, vector<64x128xf32>
    %2 = vector.extract_strided_slice %0 {offsets = [0, 0], sizes = [1, 128], strides = [1, 1]} : vector<8x128xf32> to vector<1x128xf32>
    %3 = vector.broadcast %2 : vector<1x128xf32> to vector<64x128xf32>
    %4 = arith.mulf %1, %3 : vector<64x128xf32>
    %5 = vector.extract_strided_slice %0 {offsets = [1, 0], sizes = [1, 128], strides = [1, 1]} : vector<8x128xf32> to vector<1x128xf32>
    %6 = vector.broadcast %5 : vector<1x128xf32> to vector<64x128xf32>
    %7 = arith.addf %4, %6 : vector<64x128xf32>
    %cst = arith.constant 0.000000e+00 : f32
    %8 = vector.broadcast %cst : f32 to vector<64x128xf32>
    %9 = arith.maximumf %7, %8 : vector<64x128xf32>
    %c0_3 = arith.constant 0 : index
    %c0_4 = arith.constant 0 : index
    %10 = vector.load %arg3[%c0_3, %c0_4] : memref<64x128xf32, #tpu.memory_space<vmem>>, vector<64x128xf32>
    tpu.vector_store %arg3[%c0_3, %c0_4], %9 {strides = array<i32>} : memref<64x128xf32, #tpu.memory_space<vmem>>, vector<64x128xf32>,
    return
  }
  func.func @transform_0(%arg0: i32) -> (i32, i32) {
    %c0_i32 = arith.constant 0 : i32
    %c0_i32_0 = arith.constant 0 : i32
    return %arg0, %c0_i32 : i32, i32
  }
  func.func @transform_1(%arg0: i32) -> (i32, i32) {
    %c0_i32 = arith.constant 0 : i32
    %c0_i32_0 = arith.constant 0 : i32
    %c0_i32_1 = arith.constant 0 : i32
    return %c0_i32, %c0_i32_0 : i32, i32
  }
  func.func @transform_2(%arg0: i32) -> (i32, i32) {
    %c0_i32 = arith.constant 0 : i32
    %c0_i32_0 = arith.constant 0 : i32
    return %arg0, %c0_i32 : i32, i32
  }
}

module attributes {stable_mosaic.version = 11 : i64} {
  func.func @kernel(%arg0: i32, %arg1: memref<64x72xbf16, #tpu.memory_space<vmem>>, %arg2: memref<72x128xbf16, #tpu.memory_space<vmem>>, %arg3: memref<8x128xf32, #tpu.memory_space<vmem>>, %arg4: memref<64x128xf32, #tpu.memory_space<vmem>>, %arg5: memref<8x128xf32, #tpu.memory_space<vmem>>) attributes {dimension_semantics = [#tpu.dimension_semantics<parallel>], iteration_bounds = array<i64: 2>, scalar_prefetch = 0 : i64, scratch_operands = 0 : i64, tpu.core_type = #tpu.core_type<tc>, window_params = [{transform_indices = @transform_0, window_bounds = array<i64: 64, 72>}, {pipeline_mode = #tpu.pipeline_mode<synchronous>, transform_indices = @transform_1, window_bounds = array<i64: 72, 128>}, {pipeline_mode = #tpu.pipeline_mode<synchronous>, transform_indices = @transform_2, window_bounds = array<i64: 8, 128>}, {transform_indices = @transform_3, window_bounds = array<i64: 64, 128>}, {transform_indices = @transform_4, window_bounds = array<i64: 8, 128>}]} {
    %c0 = arith.constant 0 : index
    %c0_0 = arith.constant 0 : index
    %0 = vector.load %arg1[%c0, %c0_0] : memref<64x72xbf16, #tpu.memory_space<vmem>>, vector<64x72xbf16>
    %c0_1 = arith.constant 0 : index
    %c0_2 = arith.constant 0 : index
    %1 = vector.load %arg2[%c0_1, %c0_2] : memref<72x128xbf16, #tpu.memory_space<vmem>>, vector<72x128xbf16>
    %cst = arith.constant dense<0.000000e+00> : vector<64x128xf32>
    %2 = tpu.matmul %0, %1, %cst {dimension_numbers = #tpu.dot_dimension_numbers<[1], [0], [0], [1], [0, 0, 1, 1], [], []>} : vector<64x72xbf16>, vector<72x128xbf16>, vector<64x128xf32> -> vector<64x128xf32>
    %c0_3 = arith.constant 0 : index
    %c0_4 = arith.constant 0 : index
    %3 = vector.load %arg3[%c0_3, %c0_4] : memref<8x128xf32, #tpu.memory_space<vmem>>, vector<8x128xf32>
    %4 = vector.extract_strided_slice %3 {offsets = [0, 0], sizes = [1, 128], strides = [1, 1]} : vector<8x128xf32> to vector<1x128xf32>
    %5 = vector.broadcast %4 : vector<1x128xf32> to vector<64x128xf32>
    %6 = arith.addf %2, %5 : vector<64x128xf32>
    %cst_5 = arith.constant dense<0.000000e+00> : vector<128xf32>
    %7 = vector.multi_reduction <add>, %6, %cst_5 [0] : vector<64x128xf32> to vector<128xf32>
    %8 = vector.shape_cast %7 : vector<128xf32> to vector<1x128xf32>
    %9 = arith.mulf %6, %6 : vector<64x128xf32>
    %cst_6 = arith.constant dense<0.000000e+00> : vector<128xf32>
    %10 = vector.multi_reduction <add>, %9, %cst_6 [0] : vector<64x128xf32> to vector<128xf32>
    %11 = vector.shape_cast %10 : vector<128xf32> to vector<1x128xf32>
    %12 = tpu.iota {dimensions = array<i32: 0>} : vector<8x1xi32>
    %c0_i32 = arith.constant 0 : i32
    %13 = vector.broadcast %c0_i32 : i32 to vector<8x1xi32>
    %14 = arith.cmpi eq, %12, %13 : vector<8x1xi32>
    %c1_i32 = arith.constant 1 : i32
    %15 = vector.broadcast %c1_i32 : i32 to vector<8x1xi32>
    %16 = arith.cmpi eq, %12, %15 : vector<8x1xi32>
    %cst_7 = arith.constant 0.000000e+00 : f32
    %17 = vector.shape_cast %16 : vector<8x1xi1> to vector<8x1xi1>
    %18 = vector.broadcast %17 : vector<8x1xi1> to vector<8x128xi1>
    %19 = vector.shape_cast %11 : vector<1x128xf32> to vector<1x128xf32>
    %20 = vector.broadcast %19 : vector<1x128xf32> to vector<8x128xf32>
    %21 = vector.broadcast %cst_7 : f32 to vector<8x128xf32>
    %22 = arith.select %18, %20, %21 : vector<8x128xi1>, vector<8x128xf32>
    %23 = vector.shape_cast %14 : vector<8x1xi1> to vector<8x1xi1>
    %24 = vector.broadcast %23 : vector<8x1xi1> to vector<8x128xi1>
    %25 = vector.shape_cast %8 : vector<1x128xf32> to vector<1x128xf32>
    %26 = vector.broadcast %25 : vector<1x128xf32> to vector<8x128xf32>
    %27 = arith.select %24, %26, %22 : vector<8x128xi1>, vector<8x128xf32>
    %c0_8 = arith.constant 0 : index
    %c0_9 = arith.constant 0 : index
    %28 = vector.load %arg5[%c0_8, %c0_9] : memref<8x128xf32, #tpu.memory_space<vmem>>, vector<8x128xf32>
    tpu.vector_store %arg5[%c0_8, %c0_9], %27 {strides = array<i32>} : memref<8x128xf32, #tpu.memory_space<vmem>>, vector<8x128xf32>,
    %c0_10 = arith.constant 0 : index
    %c0_11 = arith.constant 0 : index
    %29 = vector.load %arg4[%c0_10, %c0_11] : memref<64x128xf32, #tpu.memory_space<vmem>>, vector<64x128xf32>
    tpu.vector_store %arg4[%c0_10, %c0_11], %6 {strides = array<i32>} : memref<64x128xf32, #tpu.memory_space<vmem>>, vector<64x128xf32>,
    return
  }
  func.func @transform_0(%arg0: i32) -> (i32, i32) {
    %c0_i32 = arith.constant 0 : i32
    %c0_i32_0 = arith.constant 0 : i32
    return %arg0, %c0_i32 : i32, i32
  }
  func.func @transform_1(%arg0: i32) -> (i32, i32) {
    %c0_i32 = arith.constant 0 : i32
    %c0_i32_0 = arith.constant 0 : i32
    %c0_i32_1 = arith.constant 0 : i32
    return %c0_i32, %c0_i32_0 : i32, i32
  }
  func.func @transform_2(%arg0: i32) -> (i32, i32) {
    %c0_i32 = arith.constant 0 : i32
    %c0_i32_0 = arith.constant 0 : i32
    %c0_i32_1 = arith.constant 0 : i32
    return %c0_i32, %c0_i32_0 : i32, i32
  }
  func.func @transform_3(%arg0: i32) -> (i32, i32) {
    %c0_i32 = arith.constant 0 : i32
    %c0_i32_0 = arith.constant 0 : i32
    return %arg0, %c0_i32 : i32, i32
  }
  func.func @transform_4(%arg0: i32) -> (i32, i32) {
    %c0_i32 = arith.constant 0 : i32
    %c0_i32_0 = arith.constant 0 : i32
    return %arg0, %c0_i32 : i32, i32
  }
}

module attributes {stable_mosaic.version = 11 : i64} {
  func.func @kernel(%arg0: i32, %arg1: memref<64x4xbf16, #tpu.memory_space<vmem>>, %arg2: memref<4x128xbf16, #tpu.memory_space<vmem>>, %arg3: memref<8x128xf32, #tpu.memory_space<vmem>>, %arg4: memref<64x128xf32, #tpu.memory_space<vmem>>) attributes {dimension_semantics = [#tpu.dimension_semantics<parallel>], iteration_bounds = array<i64: 8>, scalar_prefetch = 0 : i64, scratch_operands = 0 : i64, tpu.core_type = #tpu.core_type<tc>, window_params = [{transform_indices = @transform_0, window_bounds = array<i64: 64, 4>}, {pipeline_mode = #tpu.pipeline_mode<synchronous>, transform_indices = @transform_1, window_bounds = array<i64: 4, 128>}, {pipeline_mode = #tpu.pipeline_mode<synchronous>, transform_indices = @transform_2, window_bounds = array<i64: 8, 128>}, {transform_indices = @transform_3, window_bounds = array<i64: 64, 128>}]} {
    %c0 = arith.constant 0 : index
    %c0_0 = arith.constant 0 : index
    %0 = vector.load %arg1[%c0, %c0_0] : memref<64x4xbf16, #tpu.memory_space<vmem>>, vector<64x4xbf16>
    %c0_1 = arith.constant 0 : index
    %c0_2 = arith.constant 0 : index
    %1 = vector.load %arg2[%c0_1, %c0_2] : memref<4x128xbf16, #tpu.memory_space<vmem>>, vector<4x128xbf16>
    %cst = arith.constant dense<0.000000e+00> : vector<64x128xf32>
    %2 = tpu.matmul %0, %1, %cst {dimension_numbers = #tpu.dot_dimension_numbers<[1], [0], [0], [1], [0, 0, 1, 1], [], []>} : vector<64x4xbf16>, vector<4x128xbf16>, vector<64x128xf32> -> vector<64x128xf32>
    %c0_3 = arith.constant 0 : index
    %c0_4 = arith.constant 0 : index
    %3 = vector.load %arg3[%c0_3, %c0_4] : memref<8x128xf32, #tpu.memory_space<vmem>>, vector<8x128xf32>
    %4 = vector.extract_strided_slice %3 {offsets = [0, 0], sizes = [1, 128], strides = [1, 1]} : vector<8x128xf32> to vector<1x128xf32>
    %5 = vector.broadcast %4 : vector<1x128xf32> to vector<64x128xf32>
    %6 = arith.addf %2, %5 : vector<64x128xf32>
    %7 = math.tanh %6 : vector<64x128xf32>
    %c0_5 = arith.constant 0 : index
    %c0_6 = arith.constant 0 : index
    %8 = vector.load %arg4[%c0_5, %c0_6] : memref<64x128xf32, #tpu.memory_space<vmem>>, vector<64x128xf32>
    tpu.vector_store %arg4[%c0_5, %c0_6], %7 {strides = array<i32>} : memref<64x128xf32, #tpu.memory_space<vmem>>, vector<64x128xf32>,
    return
  }
  func.func @transform_0(%arg0: i32) -> (i32, i32) {
    %c0_i32 = arith.constant 0 : i32
    %c0_i32_0 = arith.constant 0 : i32
    return %arg0, %c0_i32 : i32, i32
  }
  func.func @transform_1(%arg0: i32) -> (i32, i32) {
    %c0_i32 = arith.constant 0 : i32
    %c0_i32_0 = arith.constant 0 : i32
    %c0_i32_1 = arith.constant 0 : i32
    return %c0_i32, %c0_i32_0 : i32, i32
  }
  func.func @transform_2(%arg0: i32) -> (i32, i32) {
    %c0_i32 = arith.constant 0 : i32
    %c0_i32_0 = arith.constant 0 : i32
    %c0_i32_1 = arith.constant 0 : i32
    return %c0_i32, %c0_i32_0 : i32, i32
  }
  func.func @transform_3(%arg0: i32) -> (i32, i32) {
    %c0_i32 = arith.constant 0 : i32
    %c0_i32_0 = arith.constant 0 : i32
    return %arg0, %c0_i32 : i32, i32
  }
}

</mosaic_0001>

<llo_original>
// kernel: a_call__.12
$region0: #{a_call__.12}
  #allocation0 [shape = 'u32[]', space=smem, size = 0x4, offset = 0x4, fixed_abs, tag = 'smem constant byte address 0x4 - core index']
  #allocation1 [shape = 'u32[72,128]{1,0:T(1,128)}', space=vmem, size = 0x9000, scoped, tag = 'internal scratch']
  %s0 = inlined_call_operand.vmem [shape: f32[32,128], index: 0, kind: input, shape index: {}]
  %s1 = inlined_call_operand.vmem [shape: f32[8,128], index: 1, kind: input, shape index: {}]
  %s2 = inlined_call_operand.vmem [shape: f32[32,128], index: 2, kind: output, shape index: {}]
  %s3 = sld [smem:[#allocation0]]
  $region18: #{a_call__.12} parent=0
    _
  %s5 = ssub.s32 1, %s3
  %s6 = scalar_select 0, %s5, %s3
  // Predicated region
  $region2: #{a_call__.12} parent=0 // pred_check
    _
  $region3: #{a_call__.12} parent=0 // pred_check_branch
    %8 = sbr.rel (0) target = $region5
  $region4: #{a_call__.12} parent=0 // pred_region
    _
  $region5: #{a_call__.12} parent=0 // pred_fallthru
    _
  // Predicated region
  $region6: #{a_call__.12} parent=0 // pred_check
    _
  $region7: #{a_call__.12} parent=0 // pred_check_branch
    %10 = sbr.rel (0) target = $region9
  $region8: #{a_call__.12} parent=0 // pred_region
    _
  $region9: #{a_call__.12} parent=0 // pred_fallthru
    _
  %v11 = vld [vmem:[%s1] sm:$0xff]
  %v12 = vld [vmem:[%s0] sm:$0xff]
  %v13 = vld [vmem:[%s0 + $0x8] sm:$0xff]
  %v14 = vld [vmem:[%s0 + $0x10] sm:$0xff]
  %v15 = vld [vmem:[%s0 + $0x18] sm:$0xff]
  %v16 = vperm.slane %v11, 0
  %v17 = vmul.f32 %v12, %v16
  %v18 = vmul.f32 %v13, %v16
  %v19 = vmul.f32 %v14, %v16
  %v20 = vmul.f32 %v15, %v16
  %v21 = vperm.slane %v11, 1
  %v22 = vadd.f32 %v17, %v21
  %v23 = vadd.f32 %v18, %v21
  %v24 = vadd.f32 %v19, %v21
  %v25 = vadd.f32 %v20, %v21
  %v26 = vmax.f32 %v22, 0.0
  %v27 = vmax.f32 %v23, 0.0
  %v28 = vmax.f32 %v24, 0.0
  %v29 = vmax.f32 %v25, 0.0
  %30 = vst [vmem:[%s2] sm:$0xff] %v26
  %31 = vst [vmem:[%s2 + $0x8] sm:$0xff] %v27
  %32 = vst [vmem:[%s2 + $0x10] sm:$0xff] %v28
  %33 = vst [vmem:[%s2 + $0x18] sm:$0xff] %v29
  // Predicated region
  $region10: #{a_call__.12} parent=0 // pred_check
    _
  $region11: #{a_call__.12} parent=0 // pred_check_branch
    %35 = sbr.rel (0) target = $region13
  $region12: #{a_call__.12} parent=0 // pred_region
    _
  $region13: #{a_call__.12} parent=0 // pred_fallthru
    _
  // Predicated region
  $region14: #{a_call__.12} parent=0 // pred_check
    _
  $region15: #{a_call__.12} parent=0 // pred_check_branch
    %37 = sbr.rel (0) target = $region17
  $region16: #{a_call__.12} parent=0 // pred_region
    _
  $region17: #{a_call__.12} parent=0 // pred_fallthru
    _

// kernel: a_call__.11
$region0: #{a_call__.11}
  #allocation0 [shape = 'u32[]', space=smem, size = 0x4, offset = 0x4, fixed_abs, tag = 'smem constant byte address 0x4 - core index']
  #allocation1 [shape = 'u32[72,128]{1,0:T(1,128)}', space=vmem, size = 0x9000, scoped, tag = 'internal scratch']
  %s0 = inlined_call_operand.vmem [shape: bf16[32,128], index: 0, kind: input, shape index: {}]
  %s1 = inlined_call_operand.vmem [shape: bf16[128,128], index: 1, kind: input, shape index: {}]
  %s2 = inlined_call_operand.vmem [shape: f32[8,128], index: 2, kind: input, shape index: {}]
  %s3 = inlined_call_operand.vmem [shape: f32[32,128], index: 3, kind: output, shape index: {0}]
  %s4 = inlined_call_operand.vmem [shape: f32[8,128], index: 4, kind: output, shape index: {1}]
  %5 = xla_tuple %s3, %s4
  %s6 = sld [smem:[#allocation0]]
  $region30: #{a_call__.11} parent=0
    _
  %s8 = ssub.s32 1, %s6
  %s9 = scalar_select 0, %s8, %s6
  // Predicated region
  $region2: #{a_call__.11} parent=0 // pred_check
    _
  $region3: #{a_call__.11} parent=0 // pred_check_branch
    %11 = sbr.rel (0) target = $region5
  $region4: #{a_call__.11} parent=0 // pred_region
    _
  $region5: #{a_call__.11} parent=0 // pred_fallthru
    _
  // Predicated region
  $region6: #{a_call__.11} parent=0 // pred_check
    _
  $region7: #{a_call__.11} parent=0 // pred_check_branch
    %13 = sbr.rel (0) target = $region9
  $region8: #{a_call__.11} parent=0 // pred_region
    _
  $region9: #{a_call__.11} parent=0 // pred_fallthru
    _
  // Predicated region
  $region10: #{a_call__.11} parent=0 // pred_check
    _
  $region11: #{a_call__.11} parent=0 // pred_check_branch
    %15 = sbr.rel (0) target = $region13
  $region12: #{a_call__.11} parent=0 // pred_region
    _
  $region13: #{a_call__.11} parent=0 // pred_fallthru
    _
  %v16 = vld [vmem:[%s0] sm:$0xf]
  %v17 = vld [vmem:[%s0 + $0x4] sm:$0xf]
  %v18 = vld [vmem:[%s0 + $0x8] sm:$0xf]
  %v19 = vld [vmem:[%s0 + $0xc] sm:$0xf]
  %v20 = vld [vmem:[%s1] sm:$0xf]
  %v21 = vld [vmem:[%s1 + $0x4] sm:$0xf]
  %v22 = vld [vmem:[%s1 + $0x8] sm:$0xf]
  %v23 = vld [vmem:[%s1 + $0xc] sm:$0xf]
  %v24 = vld [vmem:[%s1 + $0x10] sm:$0xf]
  %v25 = vld [vmem:[%s1 + $0x14] sm:$0xf]
  %v26 = vld [vmem:[%s1 + $0x18] sm:$0xf]
  %v27 = vld [vmem:[%s1 + $0x1c] sm:$0xf]
  %v28 = vld [vmem:[%s1 + $0x20] sm:$0xf]
  %v29 = vld [vmem:[%s1 + $0x24] sm:$0xf]
  %v30 = vld [vmem:[%s1 + $0x28] sm:$0xf]
  %v31 = vld [vmem:[%s1 + $0x2c] sm:$0xf]
  %v32 = vld [vmem:[%s1 + $0x30] sm:$0xf]
  %v33 = vld [vmem:[%s1 + $0x34] sm:$0xf]
  %v34 = vld [vmem:[%s1 + $0x38] sm:$0xf]
  %v35 = vld [vmem:[%s1 + $0x3c] sm:$0xf]
  %v36 = vld [vmem:[%s2] sm:$0xff]
  %v37 = vperm.slane %v36, 0
  %v42 = vunpack.c.l.b16 %v16
  %v43 = vunpack.c.l.b16 %v17
  %v44 = vunpack.c.l.b16 %v18
  %v45 = vunpack.c.l.b16 %v19
  %v46 = vpack.c.b16 %v43, %v42
  %v47 = vpack.c.b16 %v45, %v44
  %v66 = vunpack.c.l.b16 %v20
  %v67 = vunpack.c.l.b16 %v21
  %v68 = vunpack.c.l.b16 %v22
  %v69 = vunpack.c.l.b16 %v23
  %v70 = vunpack.c.l.b16 %v24
  %v71 = vunpack.c.l.b16 %v25
  %v72 = vunpack.c.l.b16 %v26
  %v73 = vunpack.c.l.b16 %v27
  %v74 = vunpack.c.l.b16 %v28
  %v75 = vunpack.c.l.b16 %v29
  %v76 = vunpack.c.l.b16 %v30
  %v77 = vunpack.c.l.b16 %v31
  %v78 = vunpack.c.l.b16 %v32
  %v79 = vunpack.c.l.b16 %v33
  %v80 = vunpack.c.l.b16 %v34
  %v81 = vunpack.c.l.b16 %v35
  %v82 = vpack.c.b16 %v67, %v66
  %v83 = vpack.c.b16 %v69, %v68
  %v84 = vpack.c.b16 %v71, %v70
  %v85 = vpack.c.b16 %v73, %v72
  %v86 = vpack.c.b16 %v75, %v74
  %v87 = vpack.c.b16 %v77, %v76
  %v88 = vpack.c.b16 %v79, %v78
  %v89 = vpack.c.b16 %v81, %v80
  %98 = vmatpush.bf16.msra.mxu0 %v89
  %99 = vmatpush.bf16.msra.mxu0 %v88
  %100 = vmatpush.bf16.msra.mxu0 %v87
  %101 = vmatpush.bf16.msra.mxu0 %v86
  %102 = vmatpush.bf16.msra.mxu0 %v85
  %103 = vmatpush.bf16.msra.mxu0 %v84
  %104 = vmatpush.bf16.msra.mxu0 %v83
  %105 = vmatpush.bf16.msra.mxu0 %v82
  %106 = vmatmul.bf16.gmra.mxu0 %v46
  %v107 = vpop.f32.mrf.mxu0
  %v108 = vadd.f32 %v37, %v107
  %v109 = vpop.f32.mrf.mxu0
  %v110 = vadd.f32 %v37, %v109
  %111 = vmatmul.bf16.gmra.mxu0 %v47
  %v112 = vpop.f32.mrf.mxu0
  %v113 = vadd.f32 %v37, %v112
  %v114 = vpop.f32.mrf.mxu0
  %v115 = vadd.f32 %v37, %v114
  %116 = vdwg.mxu0
  %v117 = vadd.f32 %v108, %v110
  %v118 = vadd.f32 %v117, %v113
  %v119 = vadd.f32 %v118, %v115
  %v120 = vrot.slane %v119, 4
  %v121 = vadd.f32 %v119, %v120
  %v122 = vrot.slane %v121, 2
  %v123 = vadd.f32 %v121, %v122
  %v124 = vrot.slane %v123, 1
  %v125 = vadd.f32 %v123, %v124
  %v126 = vmul.f32 %v108, %v108
  %v127 = vmul.f32 %v110, %v110
  %v128 = vmul.f32 %v113, %v113
  %v129 = vmul.f32 %v115, %v115
  %v130 = vadd.f32 %v126, %v127
  %v131 = vadd.f32 %v130, %v128
  %v132 = vadd.f32 %v131, %v129
  %v133 = vrot.slane %v132, 4
  %v134 = vadd.f32 %v132, %v133
  %v135 = vrot.slane %v134, 2
  %v136 = vadd.f32 %v134, %v135
  %v137 = vrot.slane %v136, 1
  %v138 = vadd.f32 %v136, %v137
  %v139 = vlaneseq
  %v140 = vshrl.u32 %v139, 7
  %vm141 = vcmp.eq.s32.totalorder %v140, 0
  %vm142 = vcmp.eq.s32.totalorder %v140, 1
  %v143 = vsel %vm142, 1, 0
  %vm144 = vcmp.eq.s32.totalorder %v143, 1
  %v145 = vsel %vm144, %v138, 0.0
  %v146 = vsel %vm141, 1, 0
  %vm147 = vcmp.eq.s32.totalorder %v146, 1
  %v148 = vsel %vm147, %v125, %v145
  %149 = vst [vmem:[%s4] sm:$0xff] %v148
  %150 = vst [vmem:[%s3] sm:$0xff] %v108
  %151 = vst [vmem:[%s3 + $0x8] sm:$0xff] %v110
  %152 = vst [vmem:[%s3 + $0x10] sm:$0xff] %v113
  %153 = vst [vmem:[%s3 + $0x18] sm:$0xff] %v115
  // Predicated region
  $region14: #{a_call__.11} parent=0 // pred_check
    _
  $region15: #{a_call__.11} parent=0 // pred_check_branch
    %155 = sbr.rel (0) target = $region17
  $region16: #{a_call__.11} parent=0 // pred_region
    _
  $region17: #{a_call__.11} parent=0 // pred_fallthru
    _
  // Predicated region
  $region18: #{a_call__.11} parent=0 // pred_check
    _
  $region19: #{a_call__.11} parent=0 // pred_check_branch
    %157 = sbr.rel (0) target = $region21
  $region20: #{a_call__.11} parent=0 // pred_region
    _
  $region21: #{a_call__.11} parent=0 // pred_fallthru
    _
  // Predicated region
  $region22: #{a_call__.11} parent=0 // pred_check
    _
  $region23: #{a_call__.11} parent=0 // pred_check_branch
    %159 = sbr.rel (0) target = $region25
  $region24: #{a_call__.11} parent=0 // pred_region
    _
  $region25: #{a_call__.11} parent=0 // pred_fallthru
    _
  // Predicated region
  $region26: #{a_call__.11} parent=0 // pred_check
    _
  $region27: #{a_call__.11} parent=0 // pred_check_branch
    %161 = sbr.rel (0) target = $region29
  $region28: #{a_call__.11} parent=0 // pred_region
    _
  $region29: #{a_call__.11} parent=0 // pred_fallthru
    _

// kernel: a_call__.13
$region0: #{a_call__.13}
  #allocation0 [shape = 'u32[]', space=smem, size = 0x4, offset = 0x4, fixed_abs, tag = 'smem constant byte address 0x4 - core index']
  #allocation1 [shape = 'u32[72,128]{1,0:T(1,128)}', space=vmem, size = 0x9000, scoped, tag = 'internal scratch']
  %s0 = inlined_call_operand.vmem [shape: bf16[32,288], index: 0, kind: input, shape index: {}]
  %s1 = inlined_call_operand.vmem [shape: bf16[288,128], index: 1, kind: input, shape index: {}]
  %s2 = inlined_call_operand.vmem [shape: f32[8,128], index: 2, kind: input, shape index: {}]
  %s3 = inlined_call_operand.vmem [shape: f32[32,128], index: 3, kind: output, shape index: {0}]
  %s4 = inlined_call_operand.vmem [shape: f32[8,128], index: 4, kind: output, shape index: {1}]
  %5 = xla_tuple %s3, %s4
  %s6 = sld [smem:[#allocation0]]
  $region30: #{a_call__.13} parent=0
    _
  %s8 = ssub.s32 1, %s6
  %s9 = scalar_select 0, %s8, %s6
  // Predicated region
  $region2: #{a_call__.13} parent=0 // pred_check
    _
  $region3: #{a_call__.13} parent=0 // pred_check_branch
    %11 = sbr.rel (0) target = $region5
  $region4: #{a_call__.13} parent=0 // pred_region
    _
  $region5: #{a_call__.13} parent=0 // pred_fallthru
    _
  // Predicated region
  $region6: #{a_call__.13} parent=0 // pred_check
    _
  $region7: #{a_call__.13} parent=0 // pred_check_branch
    %13 = sbr.rel (0) target = $region9
  $region8: #{a_call__.13} parent=0 // pred_region
    _
  $region9: #{a_call__.13} parent=0 // pred_fallthru
    _
  // Predicated region
  $region10: #{a_call__.13} parent=0 // pred_check
    _
  $region11: #{a_call__.13} parent=0 // pred_check_branch
    %15 = sbr.rel (0) target = $region13
  $region12: #{a_call__.13} parent=0 // pred_region
    _
  $region13: #{a_call__.13} parent=0 // pred_fallthru
    _
  %v17 = vld [vmem:[%s0] sm:$0xff]
  %v18 = vld [vmem:[%s0 + $0x8] sm:$0xf]
  %v19 = vld [vmem:[%s0 + $0xc] sm:$0xff]
  %v20 = vld [vmem:[%s0 + $0x14] sm:$0xf]
  %v21 = vld [vmem:[%s0 + $0x18] sm:$0xff]
  %v22 = vld [vmem:[%s0 + $0x20] sm:$0xf]
  %v23 = vld [vmem:[%s0 + $0x24] sm:$0xff]
  %v24 = vld [vmem:[%s0 + $0x2c] sm:$0xf]
  %v25 = vld [vmem:[%s1] sm:$0xf]
  %v26 = vld [vmem:[%s1 + $0x4] sm:$0xf]
  %v27 = vld [vmem:[%s1 + $0x8] sm:$0xf]
  %v28 = vld [vmem:[%s1 + $0xc] sm:$0xf]
  %v29 = vld [vmem:[%s1 + $0x10] sm:$0xf]
  %v30 = vld [vmem:[%s1 + $0x14] sm:$0xf]
  %v31 = vld [vmem:[%s1 + $0x18] sm:$0xf]
  %v32 = vld [vmem:[%s1 + $0x1c] sm:$0xf]
  %v33 = vld [vmem:[%s1 + $0x20] sm:$0xf]
  %v34 = vld [vmem:[%s1 + $0x24] sm:$0xf]
  %v35 = vld [vmem:[%s1 + $0x28] sm:$0xf]
  %v36 = vld [vmem:[%s1 + $0x2c] sm:$0xf]
  %v37 = vld [vmem:[%s1 + $0x30] sm:$0xf]
  %v38 = vld [vmem:[%s1 + $0x34] sm:$0xf]
  %v39 = vld [vmem:[%s1 + $0x38] sm:$0xf]
  %v40 = vld [vmem:[%s1 + $0x3c] sm:$0xf]
  %v41 = vld [vmem:[%s1 + $0x40] sm:$0xf]
  %v42 = vld [vmem:[%s1 + $0x44] sm:$0xf]
  %v43 = vld [vmem:[%s1 + $0x48] sm:$0xf]
  %v44 = vld [vmem:[%s1 + $0x4c] sm:$0xf]
  %v45 = vld [vmem:[%s1 + $0x50] sm:$0xf]
  %v46 = vld [vmem:[%s1 + $0x54] sm:$0xf]
  %v47 = vld [vmem:[%s1 + $0x58] sm:$0xf]
  %v48 = vld [vmem:[%s1 + $0x5c] sm:$0xf]
  %v49 = vld [vmem:[%s1 + $0x60] sm:$0xf]
  %v50 = vld [vmem:[%s1 + $0x64] sm:$0xf]
  %v51 = vld [vmem:[%s1 + $0x68] sm:$0xf]
  %v52 = vld [vmem:[%s1 + $0x6c] sm:$0xf]
  %v53 = vld [vmem:[%s1 + $0x70] sm:$0xf]
  %v54 = vld [vmem:[%s1 + $0x74] sm:$0xf]
  %v55 = vld [vmem:[%s1 + $0x78] sm:$0xf]
  %v56 = vld [vmem:[%s1 + $0x7c] sm:$0xf]
  %v57 = vld [vmem:[%s1 + $0x80] sm:$0xf]
  %v58 = vld [vmem:[%s1 + $0x84] sm:$0xf]
  %v59 = vld [vmem:[%s1 + $0x88] sm:$0xf]
  %v60 = vld [vmem:[%s1 + $0x8c] sm:$0xf]
  %v61 = vld [vmem:[%s2] sm:$0xff]
  %v62 = vperm.slane %v61, 0
  %v71 = vunpack.c.l.b16 %v17
  %v72 = vunpack.c.h.b16 %v17
  %v73 = vunpack.c.l.b16 %v18
  %v74 = vunpack.c.l.b16 %v19
  %v75 = vunpack.c.h.b16 %v19
  %v76 = vunpack.c.l.b16 %v20
  %v77 = vunpack.c.l.b16 %v21
  %v78 = vunpack.c.h.b16 %v21
  %v79 = vunpack.c.l.b16 %v22
  %v80 = vunpack.c.l.b16 %v23
  %v81 = vunpack.c.h.b16 %v23
  %v82 = vunpack.c.l.b16 %v24
  %v83 = vpack.c.b16 %v74, %v71
  %v84 = vpack.c.b16 %v75, %v72
  %v85 = vpack.c.b16 %v76, %v73
  %v86 = vpack.c.b16 %v80, %v77
  %v87 = vpack.c.b16 %v81, %v78
  %v88 = vpack.c.b16 %v82, %v79
  %v129 = vunpack.c.l.b16 %v25
  %v130 = vunpack.c.l.b16 %v26
  %v131 = vunpack.c.l.b16 %v27
  %v132 = vunpack.c.l.b16 %v28
  %v133 = vunpack.c.l.b16 %v29
  %v134 = vunpack.c.l.b16 %v30
  %v135 = vunpack.c.l.b16 %v31
  %v136 = vunpack.c.l.b16 %v32
  %v137 = vunpack.c.l.b16 %v33
  %v138 = vunpack.c.l.b16 %v34
  %v139 = vunpack.c.l.b16 %v35
  %v140 = vunpack.c.l.b16 %v36
  %v141 = vunpack.c.l.b16 %v37
  %v142 = vunpack.c.l.b16 %v38
  %v143 = vunpack.c.l.b16 %v39
  %v144 = vunpack.c.l.b16 %v40
  %v145 = vunpack.c.l.b16 %v41
  %v146 = vunpack.c.l.b16 %v42
  %v147 = vunpack.c.l.b16 %v43
  %v148 = vunpack.c.l.b16 %v44
  %v149 = vunpack.c.l.b16 %v45
  %v150 = vunpack.c.l.b16 %v46
  %v151 = vunpack.c.l.b16 %v47
  %v152 = vunpack.c.l.b16 %v48
  %v153 = vunpack.c.l.b16 %v49
  %v154 = vunpack.c.l.b16 %v50
  %v155 = vunpack.c.l.b16 %v51
  %v156 = vunpack.c.l.b16 %v52
  %v157 = vunpack.c.l.b16 %v53
  %v158 = vunpack.c.l.b16 %v54
  %v159 = vunpack.c.l.b16 %v55
  %v160 = vunpack.c.l.b16 %v56
  %v161 = vunpack.c.l.b16 %v57
  %v162 = vunpack.c.l.b16 %v58
  %v163 = vunpack.c.l.b16 %v59
  %v164 = vunpack.c.l.b16 %v60
  %v165 = vpack.c.b16 %v130, %v129
  %v166 = vpack.c.b16 %v132, %v131
  %v167 = vpack.c.b16 %v134, %v133
  %v168 = vpack.c.b16 %v136, %v135
  %v169 = vpack.c.b16 %v138, %v137
  %v170 = vpack.c.b16 %v140, %v139
  %v171 = vpack.c.b16 %v142, %v141
  %v172 = vpack.c.b16 %v144, %v143
  %v173 = vpack.c.b16 %v146, %v145
  %v174 = vpack.c.b16 %v148, %v147
  %v175 = vpack.c.b16 %v150, %v149
  %v176 = vpack.c.b16 %v152, %v151
  %v177 = vpack.c.b16 %v154, %v153
  %v178 = vpack.c.b16 %v156, %v155
  %v179 = vpack.c.b16 %v158, %v157
  %v180 = vpack.c.b16 %v160, %v159
  %v181 = vpack.c.b16 %v162, %v161
  %v182 = vpack.c.b16 %v164, %v163
  %vm201 = vcmask 261120
  %v203 = vsel %vm201, %v85, 0
  %v206 = vsel %vm201, %v88, 0
  %208 = vmatpush.bf16.msra.mxu0 %v172
  %209 = vmatpush.bf16.msra.mxu0 %v171
  %210 = vmatpush.bf16.msra.mxu0 %v170
  %211 = vmatpush.bf16.msra.mxu0 %v169
  %212 = vmatpush.bf16.msra.mxu0 %v168
  %213 = vmatpush.bf16.msra.mxu0 %v167
  %214 = vmatpush.bf16.msra.mxu0 %v166
  %215 = vmatpush.bf16.msra.mxu0 %v165
  %216 = vmatmul.bf16.gmra.mxu0 %v83
  %v217 = vpop.f32.mrf.mxu0
  %v218 = vadd.f32 %v62, %v217
  %v219 = vpop.f32.mrf.mxu0
  %v220 = vadd.f32 %v62, %v219
  %221 = vmatmul.bf16.gmra.mxu0 %v86
  %v222 = vpop.f32.mrf.mxu0
  %v223 = vadd.f32 %v62, %v222
  %v224 = vpop.f32.mrf.mxu0
  %v225 = vadd.f32 %v62, %v224
  %226 = vdwg.mxu0
  %227 = vmatpush.bf16.msra.mxu0 %v180
  %228 = vmatpush.bf16.msra.mxu0 %v179
  %229 = vmatpush.bf16.msra.mxu0 %v178
  %230 = vmatpush.bf16.msra.mxu0 %v177
  %231 = vmatpush.bf16.msra.mxu0 %v176
  %232 = vmatpush.bf16.msra.mxu0 %v175
  %233 = vmatpush.bf16.msra.mxu0 %v174
  %234 = vmatpush.bf16.msra.mxu0 %v173
  %235 = vmatmul.bf16.gmra.mxu0 %v84
  %v236 = vpop.f32.mrf.mxu0
  %v237 = vadd.f32 %v218, %v236
  %v238 = vpop.f32.mrf.mxu0
  %v239 = vadd.f32 %v220, %v238
  %240 = vmatmul.bf16.gmra.mxu0 %v87
  %v241 = vpop.f32.mrf.mxu0
  %v242 = vadd.f32 %v223, %v241
  %v243 = vpop.f32.mrf.mxu0
  %v244 = vadd.f32 %v225, %v243
  %245 = vdwg.mxu0
  %246 = vmatpush.bf16.msra.mxu0 0
  %247 = vmatpush.bf16.msra.mxu0 0
  %248 = vmatpush.bf16.msra.mxu0 0
  %249 = vmatpush.bf16.msra.mxu0 0
  %250 = vmatpush.bf16.msra.mxu0 0
  %251 = vmatpush.bf16.msra.mxu0 0
  %252 = vmatpush.bf16.msra.mxu0 %v182
  %253 = vmatpush.bf16.msra.mxu0 %v181
  %254 = vmatmul.bf16.gmra.mxu0 %v203
  %v255 = vpop.f32.mrf.mxu0
  %v256 = vadd.f32 %v237, %v255
  %v257 = vpop.f32.mrf.mxu0
  %v258 = vadd.f32 %v239, %v257
  %259 = vmatmul.bf16.gmra.mxu0 %v206
  %v260 = vpop.f32.mrf.mxu0
  %v261 = vadd.f32 %v242, %v260
  %v262 = vpop.f32.mrf.mxu0
  %v263 = vadd.f32 %v244, %v262
  %264 = vdwg.mxu0
  %v265 = vadd.f32 %v256, %v258
  %v266 = vadd.f32 %v265, %v261
  %v267 = vadd.f32 %v266, %v263
  %v268 = vrot.slane %v267, 4
  %v269 = vadd.f32 %v267, %v268
  %v270 = vrot.slane %v269, 2
  %v271 = vadd.f32 %v269, %v270
  %v272 = vrot.slane %v271, 1
  %v273 = vadd.f32 %v271, %v272
  %v274 = vmul.f32 %v256, %v256
  %v275 = vmul.f32 %v258, %v258
  %v276 = vmul.f32 %v261, %v261
  %v277 = vmul.f32 %v263, %v263
  %v278 = vadd.f32 %v274, %v275
  %v279 = vadd.f32 %v278, %v276
  %v280 = vadd.f32 %v279, %v277
  %v281 = vrot.slane %v280, 4
  %v282 = vadd.f32 %v280, %v281
  %v283 = vrot.slane %v282, 2
  %v284 = vadd.f32 %v282, %v283
  %v285 = vrot.slane %v284, 1
  %v286 = vadd.f32 %v284, %v285
  %v287 = vlaneseq
  %v288 = vshrl.u32 %v287, 7
  %vm289 = vcmp.eq.s32.totalorder %v288, 0
  %vm290 = vcmp.eq.s32.totalorder %v288, 1
  %v291 = vsel %vm290, 1, 0
  %vm292 = vcmp.eq.s32.totalorder %v291, 1
  %v293 = vsel %vm292, %v286, 0.0
  %v294 = vsel %vm289, 1, 0
  %vm295 = vcmp.eq.s32.totalorder %v294, 1
  %v296 = vsel %vm295, %v273, %v293
  %297 = vst [vmem:[%s4] sm:$0xff] %v296
  %298 = vst [vmem:[%s3] sm:$0xff] %v256
  %299 = vst [vmem:[%s3 + $0x8] sm:$0xff] %v258
  %300 = vst [vmem:[%s3 + $0x10] sm:$0xff] %v261
  %301 = vst [vmem:[%s3 + $0x18] sm:$0xff] %v263
  // Predicated region
  $region14: #{a_call__.13} parent=0 // pred_check
    _
  $region15: #{a_call__.13} parent=0 // pred_check_branch
    %303 = sbr.rel (0) target = $region17
  $region16: #{a_call__.13} parent=0 // pred_region
    _
  $region17: #{a_call__.13} parent=0 // pred_fallthru
    _
  // Predicated region
  $region18: #{a_call__.13} parent=0 // pred_check
    _
  $region19: #{a_call__.13} parent=0 // pred_check_branch
    %305 = sbr.rel (0) target = $region21
  $region20: #{a_call__.13} parent=0 // pred_region
    _
  $region21: #{a_call__.13} parent=0 // pred_fallthru
    _
  // Predicated region
  $region22: #{a_call__.13} parent=0 // pred_check
    _
  $region23: #{a_call__.13} parent=0 // pred_check_branch
    %307 = sbr.rel (0) target = $region25
  $region24: #{a_call__.13} parent=0 // pred_region
    _
  $region25: #{a_call__.13} parent=0 // pred_fallthru
    _
  // Predicated region
  $region26: #{a_call__.13} parent=0 // pred_check
    _
  $region27: #{a_call__.13} parent=0 // pred_check_branch
    %309 = sbr.rel (0) target = $region29
  $region28: #{a_call__.13} parent=0 // pred_region
    _
  $region29: #{a_call__.13} parent=0 // pred_fallthru
    _

// kernel: tile.23
$region0: #{tile.23}
  #allocation0 [shape = 's32[1]{0}', space=sflag, size = 0x4, scoped, tag = 'scoped memory for tile.23']
  %s0 = inlined_call_operand.vmem [shape: f32[8], index: 0, kind: input, shape index: {}]
  %s1 = inlined_call_operand.vmem [shape: f32[4,8], index: 1, kind: output, shape index: {}]
  // Predicated region
  $region2: #{tile.23} parent=0 // pred_check
    _
  $region3: #{tile.23} parent=0 // pred_check_branch
    %3 = sbr.rel (0) target = $region5
  $region4: #{tile.23} parent=0 // pred_region
    _
  $region5: #{tile.23} parent=0 // pred_fallthru
    _
  %v4 = vld [vmem:[%s0] ss:$0 sm:$0xff]
  %5 = vst [vmem:[%s1] sm:$0xf] %v4

// kernel: tile.24
$region0: #{tile.24}
  %s0 = inlined_call_operand.vmem [shape: f32[4,8], index: 0, kind: input, shape index: {}]
  %s1 = inlined_call_operand.vmem [shape: f32[32], index: 1, kind: output, shape index: {}]
  $region1: #{tile.24} parent=0
    #allocation0 [shape = 'u8[4096]{0}', space=vmem, size = 0x1000, scoped, tag = 'scoped mem for output reshape']
    #allocation1 [shape = 'u8[4096]{0}', space=vmem, size = 0x1000, scoped, tag = 'scoped mem for input reshape']
    %s3 = ssub.s32 16, 1
    %v4 = vld [vmem:[%s0] sm:%s3]
    %5 = vst [vmem:[#allocation1] sm:%s3] %v4
    %v6 = vld [vmem:[#allocation1] sm:$0x1]
    %vm7 = vcmask 64512
    %8 = vst.msk [vmem:[#allocation0] sm:$0x1] %vm7, %v6
    %s9 = scalar_lea.vmem [#allocation1], 3
    %v10 = vld [vmem:[%s9] sm:$0x1]
    %11 = vrot.lane.b32.xlu0 %v10, 24
    %v12 = vpop.permute.xlu0 %11
    %vm13 = vcmask 261312
    %14 = vst.msk [vmem:[#allocation0] sm:$0x1] %vm13, %v12
    %s15 = scalar_lea.vmem [#allocation1], 2
    %v16 = vld [vmem:[%s15] sm:$0x1]
    %17 = vrot.lane.b32.xlu0 %v16, 16
    %v18 = vpop.permute.xlu0 %17
    %vm19 = vcmask 195712
    %20 = vst.msk [vmem:[#allocation0] sm:$0x1] %vm19, %v18
    %s21 = scalar_lea.vmem [#allocation1], 1
    %v22 = vld [vmem:[%s21] sm:$0x1]
    %23 = vrot.lane.b32.xlu0 %v22, 8
    %v24 = vpop.permute.xlu0 %23
    %vm25 = vcmask 130112
    %26 = vst.msk [vmem:[#allocation0] sm:$0x1] %vm25, %v24
    %s28 = ssub.s32 2, 1
    %v29 = vld [vmem:[#allocation0] sm:%s28]
    %s31 = ssub.s32 2, 1
    %32 = vst [vmem:[%s1] sm:%s31] %v29

// kernel: a_call__.15
$region0: #{a_call__.15}
  #allocation0 [shape = 'u32[]', space=smem, size = 0x4, offset = 0x4, fixed_abs, tag = 'smem constant byte address 0x4 - core index']
  #allocation1 [shape = 'u32[72,128]{1,0:T(1,128)}', space=vmem, size = 0x9000, scoped, tag = 'internal scratch']
  %s0 = inlined_call_operand.vmem [shape: bf16[32,144], index: 0, kind: input, shape index: {}]
  %s1 = inlined_call_operand.vmem [shape: bf16[144,128], index: 1, kind: input, shape index: {}]
  %s2 = inlined_call_operand.vmem [shape: f32[8,128], index: 2, kind: input, shape index: {}]
  %s3 = inlined_call_operand.vmem [shape: f32[32,128], index: 3, kind: output, shape index: {0}]
  %s4 = inlined_call_operand.vmem [shape: f32[8,128], index: 4, kind: output, shape index: {1}]
  %5 = xla_tuple %s3, %s4
  %s6 = sld [smem:[#allocation0]]
  $region30: #{a_call__.15} parent=0
    _
  %s8 = ssub.s32 1, %s6
  %s9 = scalar_select 0, %s8, %s6
  // Predicated region
  $region2: #{a_call__.15} parent=0 // pred_check
    _
  $region3: #{a_call__.15} parent=0 // pred_check_branch
    %11 = sbr.rel (0) target = $region5
  $region4: #{a_call__.15} parent=0 // pred_region
    _
  $region5: #{a_call__.15} parent=0 // pred_fallthru
    _
  // Predicated region
  $region6: #{a_call__.15} parent=0 // pred_check
    _
  $region7: #{a_call__.15} parent=0 // pred_check_branch
    %13 = sbr.rel (0) target = $region9
  $region8: #{a_call__.15} parent=0 // pred_region
    _
  $region9: #{a_call__.15} parent=0 // pred_fallthru
    _
  // Predicated region
  $region10: #{a_call__.15} parent=0 // pred_check
    _
  $region11: #{a_call__.15} parent=0 // pred_check_branch
    %15 = sbr.rel (0) target = $region13
  $region12: #{a_call__.15} parent=0 // pred_region
    _
  $region13: #{a_call__.15} parent=0 // pred_fallthru
    _
  %v17 = vld [vmem:[%s0] sm:$0xff]
  %v18 = vld [vmem:[%s0 + $0x8] sm:$0xff]
  %v19 = vld [vmem:[%s0 + $0x10] sm:$0xff]
  %v20 = vld [vmem:[%s0 + $0x18] sm:$0xff]
  %v21 = vld [vmem:[%s1] sm:$0xf]
  %v22 = vld [vmem:[%s1 + $0x4] sm:$0xf]
  %v23 = vld [vmem:[%s1 + $0x8] sm:$0xf]
  %v24 = vld [vmem:[%s1 + $0xc] sm:$0xf]
  %v25 = vld [vmem:[%s1 + $0x10] sm:$0xf]
  %v26 = vld [vmem:[%s1 + $0x14] sm:$0xf]
  %v27 = vld [vmem:[%s1 + $0x18] sm:$0xf]
  %v28 = vld [vmem:[%s1 + $0x1c] sm:$0xf]
  %v29 = vld [vmem:[%s1 + $0x20] sm:$0xf]
  %v30 = vld [vmem:[%s1 + $0x24] sm:$0xf]
  %v31 = vld [vmem:[%s1 + $0x28] sm:$0xf]
  %v32 = vld [vmem:[%s1 + $0x2c] sm:$0xf]
  %v33 = vld [vmem:[%s1 + $0x30] sm:$0xf]
  %v34 = vld [vmem:[%s1 + $0x34] sm:$0xf]
  %v35 = vld [vmem:[%s1 + $0x38] sm:$0xf]
  %v36 = vld [vmem:[%s1 + $0x3c] sm:$0xf]
  %v37 = vld [vmem:[%s1 + $0x40] sm:$0xf]
  %v38 = vld [vmem:[%s1 + $0x44] sm:$0xf]
  %v39 = vld [vmem:[%s2] sm:$0xff]
  %v40 = vperm.slane %v39, 0
  %v45 = vunpack.c.l.b16 %v17
  %v46 = vunpack.c.h.b16 %v17
  %v47 = vunpack.c.l.b16 %v18
  %v48 = vunpack.c.h.b16 %v18
  %v49 = vunpack.c.l.b16 %v19
  %v50 = vunpack.c.h.b16 %v19
  %v51 = vunpack.c.l.b16 %v20
  %v52 = vunpack.c.h.b16 %v20
  %v53 = vpack.c.b16 %v47, %v45
  %v54 = vpack.c.b16 %v48, %v46
  %v55 = vpack.c.b16 %v51, %v49
  %v56 = vpack.c.b16 %v52, %v50
  %v77 = vunpack.c.l.b16 %v21
  %v78 = vunpack.c.l.b16 %v22
  %v79 = vunpack.c.l.b16 %v23
  %v80 = vunpack.c.l.b16 %v24
  %v81 = vunpack.c.l.b16 %v25
  %v82 = vunpack.c.l.b16 %v26
  %v83 = vunpack.c.l.b16 %v27
  %v84 = vunpack.c.l.b16 %v28
  %v85 = vunpack.c.l.b16 %v29
  %v86 = vunpack.c.l.b16 %v30
  %v87 = vunpack.c.l.b16 %v31
  %v88 = vunpack.c.l.b16 %v32
  %v89 = vunpack.c.l.b16 %v33
  %v90 = vunpack.c.l.b16 %v34
  %v91 = vunpack.c.l.b16 %v35
  %v92 = vunpack.c.l.b16 %v36
  %v93 = vunpack.c.l.b16 %v37
  %v94 = vunpack.c.l.b16 %v38
  %v95 = vpack.c.b16 %v78, %v77
  %v96 = vpack.c.b16 %v80, %v79
  %v97 = vpack.c.b16 %v82, %v81
  %v98 = vpack.c.b16 %v84, %v83
  %v99 = vpack.c.b16 %v86, %v85
  %v100 = vpack.c.b16 %v88, %v87
  %v101 = vpack.c.b16 %v90, %v89
  %v102 = vpack.c.b16 %v92, %v91
  %v103 = vpack.c.b16 %v94, %v93
  %vm113 = vcmask 130048
  %v115 = vsel %vm113, %v54, 0
  %v118 = vsel %vm113, %v56, 0
  %120 = vmatpush.bf16.msra.mxu0 %v102
  %121 = vmatpush.bf16.msra.mxu0 %v101
  %122 = vmatpush.bf16.msra.mxu0 %v100
  %123 = vmatpush.bf16.msra.mxu0 %v99
  %124 = vmatpush.bf16.msra.mxu0 %v98
  %125 = vmatpush.bf16.msra.mxu0 %v97
  %126 = vmatpush.bf16.msra.mxu0 %v96
  %127 = vmatpush.bf16.msra.mxu0 %v95
  %128 = vmatmul.bf16.gmra.mxu0 %v53
  %v129 = vpop.f32.mrf.mxu0
  %v130 = vadd.f32 %v40, %v129
  %v131 = vpop.f32.mrf.mxu0
  %v132 = vadd.f32 %v40, %v131
  %133 = vmatmul.bf16.gmra.mxu0 %v55
  %v134 = vpop.f32.mrf.mxu0
  %v135 = vadd.f32 %v40, %v134
  %v136 = vpop.f32.mrf.mxu0
  %v137 = vadd.f32 %v40, %v136
  %138 = vdwg.mxu0
  %139 = vmatpush.bf16.msra.mxu0 0
  %140 = vmatpush.bf16.msra.mxu0 0
  %141 = vmatpush.bf16.msra.mxu0 0
  %142 = vmatpush.bf16.msra.mxu0 0
  %143 = vmatpush.bf16.msra.mxu0 0
  %144 = vmatpush.bf16.msra.mxu0 0
  %145 = vmatpush.bf16.msra.mxu0 0
  %146 = vmatpush.bf16.msra.mxu0 %v103
  %147 = vmatmul.bf16.gmra.mxu0 %v115
  %v148 = vpop.f32.mrf.mxu0
  %v149 = vadd.f32 %v130, %v148
  %v150 = vpop.f32.mrf.mxu0
  %v151 = vadd.f32 %v132, %v150
  %152 = vmatmul.bf16.gmra.mxu0 %v118
  %v153 = vpop.f32.mrf.mxu0
  %v154 = vadd.f32 %v135, %v153
  %v155 = vpop.f32.mrf.mxu0
  %v156 = vadd.f32 %v137, %v155
  %157 = vdwg.mxu0
  %v158 = vadd.f32 %v149, %v151
  %v159 = vadd.f32 %v158, %v154
  %v160 = vadd.f32 %v159, %v156
  %v161 = vrot.slane %v160, 4
  %v162 = vadd.f32 %v160, %v161
  %v163 = vrot.slane %v162, 2
  %v164 = vadd.f32 %v162, %v163
  %v165 = vrot.slane %v164, 1
  %v166 = vadd.f32 %v164, %v165
  %v167 = vmul.f32 %v149, %v149
  %v168 = vmul.f32 %v151, %v151
  %v169 = vmul.f32 %v154, %v154
  %v170 = vmul.f32 %v156, %v156
  %v171 = vadd.f32 %v167, %v168
  %v172 = vadd.f32 %v171, %v169
  %v173 = vadd.f32 %v172, %v170
  %v174 = vrot.slane %v173, 4
  %v175 = vadd.f32 %v173, %v174
  %v176 = vrot.slane %v175, 2
  %v177 = vadd.f32 %v175, %v176
  %v178 = vrot.slane %v177, 1
  %v179 = vadd.f32 %v177, %v178
  %v180 = vlaneseq
  %v181 = vshrl.u32 %v180, 7
  %vm182 = vcmp.eq.s32.totalorder %v181, 0
  %vm183 = vcmp.eq.s32.totalorder %v181, 1
  %v184 = vsel %vm183, 1, 0
  %vm185 = vcmp.eq.s32.totalorder %v184, 1
  %v186 = vsel %vm185, %v179, 0.0
  %v187 = vsel %vm182, 1, 0
  %vm188 = vcmp.eq.s32.totalorder %v187, 1
  %v189 = vsel %vm188, %v166, %v186
  %190 = vst [vmem:[%s4] sm:$0xff] %v189
  %191 = vst [vmem:[%s3] sm:$0xff] %v149
  %192 = vst [vmem:[%s3 + $0x8] sm:$0xff] %v151
  %193 = vst [vmem:[%s3 + $0x10] sm:$0xff] %v154
  %194 = vst [vmem:[%s3 + $0x18] sm:$0xff] %v156
  // Predicated region
  $region14: #{a_call__.15} parent=0 // pred_check
    _
  $region15: #{a_call__.15} parent=0 // pred_check_branch
    %196 = sbr.rel (0) target = $region17
  $region16: #{a_call__.15} parent=0 // pred_region
    _
  $region17: #{a_call__.15} parent=0 // pred_fallthru
    _
  // Predicated region
  $region18: #{a_call__.15} parent=0 // pred_check
    _
  $region19: #{a_call__.15} parent=0 // pred_check_branch
    %198 = sbr.rel (0) target = $region21
  $region20: #{a_call__.15} parent=0 // pred_region
    _
  $region21: #{a_call__.15} parent=0 // pred_fallthru
    _
  // Predicated region
  $region22: #{a_call__.15} parent=0 // pred_check
    _
  $region23: #{a_call__.15} parent=0 // pred_check_branch
    %200 = sbr.rel (0) target = $region25
  $region24: #{a_call__.15} parent=0 // pred_region
    _
  $region25: #{a_call__.15} parent=0 // pred_fallthru
    _
  // Predicated region
  $region26: #{a_call__.15} parent=0 // pred_check
    _
  $region27: #{a_call__.15} parent=0 // pred_check_branch
    %202 = sbr.rel (0) target = $region29
  $region28: #{a_call__.15} parent=0 // pred_region
    _
  $region29: #{a_call__.15} parent=0 // pred_fallthru
    _

// kernel: a_call__.18
$region0: #{a_call__.18}
  #allocation0 [shape = 'u32[]', space=smem, size = 0x4, offset = 0x4, fixed_abs, tag = 'smem constant byte address 0x4 - core index']
  #allocation1 [shape = 'u32[72,128]{1,0:T(1,128)}', space=vmem, size = 0x9000, scoped, tag = 'internal scratch']
  %s0 = inlined_call_operand.vmem [shape: f32[128,128], index: 0, kind: input, shape index: {}]
  %s1 = inlined_call_operand.vmem [shape: f32[8,128], index: 1, kind: input, shape index: {}]
  %s2 = inlined_call_operand.vmem [shape: f32[128,128], index: 2, kind: output, shape index: {}]
  %s3 = sld [smem:[#allocation0]]
  $region41: #{a_call__.18} parent=0
    _
  %s5 = ssub.s32 1, %s3
  %s6 = scalar_select 0, %s5, %s3
  loop: start=0, step=1, limit=4
  $region2: #{a_call__.18} parent=0 // loop_pre_header
    _
  $region3: #{a_call__.18} parent=0 // loop_header
    %s8 = sphi 0, %s12
    %p9 = scmp.ge.s32.totalorder %s8, 4
    %s18 = sphi 0, %s20
    %s21 = sphi 0, %s18
    %s22 = sphi 0, %s21
    %s38 = sphi 0, %s22
    %s42 = sphi 0, %s42
    %s44 = sphi 0, %s42
    %s45 = sphi 0, %s44
    %s59 = sphi 0, %s45
    %s65 = sphi 0, %s67
    %s68 = sphi 0, %s65
    %s69 = sphi 0, %s68
    %s85 = sphi 0, %s69
  $region4: #{a_call__.18} parent=0 // loop_header_branch
    %11 = sbr.rel (%p9) target = $region8
  $region5: #{a_call__.18} parent=0 // loop_body
    %s13 = ssub.s32 %s8, 1
    %s14 = ssub.s32 %s8, 2
    %s15 = sadd.s32 %s8, 1
    %s16 = ssub.s32 %s8, %s15
    %p17 = scmp.eq.s32.totalorder %s16, 0
    %s19 = sadd.s32 %s18, 1
    %s20 = scalar_select %p17, %s18, %s19
    %p23 = pneg %p17
    %p24 = scmp.eq.s32.totalorder %s8, 1
    %p25 = por %p23, %p24
    %p26 = scmp.ne.s32.totalorder %s18, %s21
    %p27 = scmp.eq.s32.totalorder %s8, 0
    %p28 = por %p26, %p27
    %p29 = scmp.ne.s32.totalorder %s18, %s21
    %p30 = scmp.eq.s32.totalorder %s13, 1
    %p31 = por %p29, %p30
    %p32 = scmp.ne.s32.totalorder %s21, %s22
    %p33 = scmp.eq.s32.totalorder %s13, 0
    %p34 = por %p32, %p33
    %p35 = scmp.ne.s32.totalorder %s21, %s22
    %p36 = scmp.eq.s32.totalorder %s14, 1
    %p37 = por %p35, %p36
    %p39 = scmp.ne.s32.totalorder %s22, %s38
    %p40 = scmp.eq.s32.totalorder %s14, 0
    %p41 = por %p39, %p40
    %s43 = sadd.s32 %s42, 1
    %p46 = scmp.eq.s32.totalorder %s8, 1
    %p47 = scmp.ne.s32.totalorder %s42, %s44
    %p48 = scmp.eq.s32.totalorder %s8, 0
    %p49 = por %p47, %p48
    %p50 = scmp.ne.s32.totalorder %s42, %s44
    %p51 = scmp.eq.s32.totalorder %s13, 1
    %p52 = por %p50, %p51
    %p53 = scmp.ne.s32.totalorder %s44, %s45
    %p54 = scmp.eq.s32.totalorder %s13, 0
    %p55 = por %p53, %p54
    %p56 = scmp.ne.s32.totalorder %s44, %s45
    %p57 = scmp.eq.s32.totalorder %s14, 1
    %p58 = por %p56, %p57
    %p60 = scmp.ne.s32.totalorder %s45, %s59
    %p61 = scmp.eq.s32.totalorder %s14, 0
    %p62 = por %p60, %p61
    %s63 = ssub.s32 %s8, %s15
    %p64 = scmp.eq.s32.totalorder %s63, 0
    %s66 = sadd.s32 %s65, 1
    %s67 = scalar_select %p64, %s65, %s66
    %p70 = pneg %p64
    %p71 = scmp.eq.s32.totalorder %s8, 1
    %p72 = por %p70, %p71
    %p73 = scmp.ne.s32.totalorder %s65, %s68
    %p74 = scmp.eq.s32.totalorder %s8, 0
    %p75 = por %p73, %p74
    %p76 = scmp.ne.s32.totalorder %s65, %s68
    %p77 = scmp.eq.s32.totalorder %s13, 1
    %p78 = por %p76, %p77
    %p79 = scmp.ne.s32.totalorder %s68, %s69
    %p80 = scmp.eq.s32.totalorder %s13, 0
    %p81 = por %p79, %p80
    %p82 = scmp.ne.s32.totalorder %s68, %s69
    %p83 = scmp.eq.s32.totalorder %s14, 1
    %p84 = por %p82, %p83
    %p86 = scmp.ne.s32.totalorder %s69, %s85
    %p87 = scmp.eq.s32.totalorder %s14, 0
    %p88 = por %p86, %p87
    %p89 = scmp.le.s32.totalorder 1, %s8
    %p90 = scmp.lt.s32.totalorder %s8, 3
    %p91 = pnand %p89, %p90
    %p92 = pneg %p91
    // Predicated region
    $region9: #{a_call__.18} parent=5 // pred_check
      _
    $region10: #{a_call__.18} parent=5 // pred_check_branch
      %94 = sbr.rel (%p91) target = $region12
    $region11: #{a_call__.18} parent=5 // pred_region
      %s95 = ssub.s32 %s8, 1
      // Predicated region
      $region13: #{a_call__.18} parent=11 // pred_check
        %p96 = pneg %p55
      $region14: #{a_call__.18} parent=11 // pred_check_branch
        %98 = sbr.rel (%p96) target = $region16
      $region15: #{a_call__.18} parent=11 // pred_region
        _
      $region16: #{a_call__.18} parent=11 // pred_fallthru
        _
    $region12: #{a_call__.18} parent=5 // pred_fallthru
      _
    %p99 = scmp.lt.s32.totalorder %s8, 2
    // Predicated region
    $region17: #{a_call__.18} parent=5 // pred_check
      %p100 = pneg %p99
    $region18: #{a_call__.18} parent=5 // pred_check_branch
      %102 = sbr.rel (%p100) target = $region20
    $region19: #{a_call__.18} parent=5 // pred_region
      // Predicated region
      $region21: #{a_call__.18} parent=19 // pred_check
        %p103 = pneg %p28
      $region22: #{a_call__.18} parent=19 // pred_check_branch
        %105 = sbr.rel (%p103) target = $region24
      $region23: #{a_call__.18} parent=19 // pred_region
        %s106 = smul.u32 8, %s8
        %p107 = scmp.lt.s32.totalorder %s106, 15
        %s108 = scalar_select %p107, %s106, 15
        %s109 = smul.addr %s108, 8
        %s110 = scalar_lea.vmem %s0, %s109
        %s111 = smul.u32 8, %s8
      $region24: #{a_call__.18} parent=19 // pred_fallthru
        _
    $region20: #{a_call__.18} parent=5 // pred_fallthru
      _
    %p112 = scmp.le.s32.totalorder 1, %s8
    %p113 = scmp.lt.s32.totalorder %s8, 3
    %p114 = pnand %p112, %p113
    %p115 = pneg %p114
    // Predicated region
    $region25: #{a_call__.18} parent=5 // pred_check
      _
    $region26: #{a_call__.18} parent=5 // pred_check_branch
      %117 = sbr.rel (%p114) target = $region28
    $region27: #{a_call__.18} parent=5 // pred_region
      %s118 = ssub.s32 %s8, 1
      %s119 = smul.u32 8, %s13
      %p120 = scmp.lt.s32.totalorder %s119, 15
      %s121 = scalar_select %p120, %s119, 15
      %s122 = smul.addr %s121, 8
      %s123 = scalar_lea.vmem %s0, %s122
      %p124 = pneg %p34
      %p125 = pneg %p31
      %p126 = pneg %p55
      %p127 = pneg %p52
      %p128 = pneg %p81
      %p129 = pneg %p78
      %s130 = smul.u32 8, %s13
      %p131 = scmp.lt.s32.totalorder %s130, 15
      %s132 = scalar_select %p131, %s130, 15
      %s133 = smul.addr %s132, 8
      %s134 = scalar_lea.vmem %s2, %s133
      %s135 = smul.u32 8, %s13
      %p136 = scmp.lt.s32.totalorder %s135, 15
      %s137 = scalar_select %p136, %s135, 15
      %s138 = smul.addr %s137, 8
      %s139 = scalar_lea.vmem %s0, %s138
      %s140 = smul.u32 8, %s13
      %s141 = smul.u32 8, %s13
      %p142 = scmp.lt.s32.totalorder %s141, 15
      %s143 = scalar_select %p142, %s141, 15
      %s144 = smul.addr %s143, 8
      %s145 = scalar_lea.vmem %s2, %s144
      %s146 = smul.u32 8, %s13
      %v147 = vld [vmem:[%s1] sm:$0xff]
      %v148 = vld [vmem:[%s139] sm:$0xff]
      %v149 = vld [vmem:[%s139 + $0x8] sm:$0xff]
      %v150 = vld [vmem:[%s139 + $0x10] sm:$0xff]
      %v151 = vld [vmem:[%s139 + $0x18] sm:$0xff]
      %v152 = vld [vmem:[%s139 + $0x20] sm:$0xff]
      %v153 = vld [vmem:[%s139 + $0x28] sm:$0xff]
      %v154 = vld [vmem:[%s139 + $0x30] sm:$0xff]
      %v155 = vld [vmem:[%s139 + $0x38] sm:$0xff]
      %v156 = vperm.slane %v147, 0
      %v157 = vmul.f32 %v148, %v156
      %v158 = vmul.f32 %v149, %v156
      %v159 = vmul.f32 %v150, %v156
      %v160 = vmul.f32 %v151, %v156
      %v161 = vmul.f32 %v152, %v156
      %v162 = vmul.f32 %v153, %v156
      %v163 = vmul.f32 %v154, %v156
      %v164 = vmul.f32 %v155, %v156
      %v165 = vperm.slane %v147, 1
      %v166 = vadd.f32 %v157, %v165
      %v167 = vadd.f32 %v158, %v165
      %v168 = vadd.f32 %v159, %v165
      %v169 = vadd.f32 %v160, %v165
      %v170 = vadd.f32 %v161, %v165
      %v171 = vadd.f32 %v162, %v165
      %v172 = vadd.f32 %v163, %v165
      %v173 = vadd.f32 %v164, %v165
      %v174 = vmax.f32 %v166, 0.0
      %v175 = vmax.f32 %v167, 0.0
      %v176 = vmax.f32 %v168, 0.0
      %v177 = vmax.f32 %v169, 0.0
      %v178 = vmax.f32 %v170, 0.0
      %v179 = vmax.f32 %v171, 0.0
      %v180 = vmax.f32 %v172, 0.0
      %v181 = vmax.f32 %v173, 0.0
      %182 = vst [vmem:[%s145] sm:$0xff] %v174
      %183 = vst [vmem:[%s145 + $0x8] sm:$0xff] %v175
      %184 = vst [vmem:[%s145 + $0x10] sm:$0xff] %v176
      %185 = vst [vmem:[%s145 + $0x18] sm:$0xff] %v177
      %186 = vst [vmem:[%s145 + $0x20] sm:$0xff] %v178
      %187 = vst [vmem:[%s145 + $0x28] sm:$0xff] %v179
      %188 = vst [vmem:[%s145 + $0x30] sm:$0xff] %v180
      %189 = vst [vmem:[%s145 + $0x38] sm:$0xff] %v181
      %s190 = smul.u32 8, %s13
      %p191 = scmp.lt.s32.totalorder %s190, 15
      %s192 = scalar_select %p191, %s190, 15
      %s193 = smul.addr %s192, 8
      %s194 = scalar_lea.vmem %s2, %s193
      // Predicated region
      $region29: #{a_call__.18} parent=27 // pred_check
        %p195 = pneg %p78
      $region30: #{a_call__.18} parent=27 // pred_check_branch
        %197 = sbr.rel (%p195) target = $region32
      $region31: #{a_call__.18} parent=27 // pred_region
        %s198 = smul.u32 8, %s13
      $region32: #{a_call__.18} parent=27 // pred_fallthru
        _
    $region28: #{a_call__.18} parent=5 // pred_fallthru
      _
    %p199 = scmp.le.s32.totalorder 2, %s8
    // Predicated region
    $region33: #{a_call__.18} parent=5 // pred_check
      %p200 = pneg %p199
    $region34: #{a_call__.18} parent=5 // pred_check_branch
      %202 = sbr.rel (%p200) target = $region36
    $region35: #{a_call__.18} parent=5 // pred_region
      %s203 = ssub.s32 %s8, 2
      // Predicated region
      $region37: #{a_call__.18} parent=35 // pred_check
        %p204 = pneg %p84
      $region38: #{a_call__.18} parent=35 // pred_check_branch
        %206 = sbr.rel (%p204) target = $region40
      $region39: #{a_call__.18} parent=35 // pred_region
        %s207 = smul.u32 8, %s14
        %p208 = scmp.lt.s32.totalorder %s207, 15
        %s209 = scalar_select %p208, %s207, 15
        %s210 = smul.addr %s209, 8
        %s211 = scalar_lea.vmem %s2, %s210
      $region40: #{a_call__.18} parent=35 // pred_fallthru
        _
    $region36: #{a_call__.18} parent=5 // pred_fallthru
      _
  $region6: #{a_call__.18} parent=0 // loop_footer
    %s12 = sadd.s32 1, %s8
  $region7: #{a_call__.18} parent=0 // loop_footer_branch
    %7 = sbr.rel target = $region3
  $region8: #{a_call__.18} parent=0 // loop_exit
    _

// kernel: a_call__.17
$region0: #{a_call__.17}
  #allocation0 [shape = 'u32[]', space=smem, size = 0x4, offset = 0x4, fixed_abs, tag = 'smem constant byte address 0x4 - core index']
  #allocation1 [shape = 'u32[72,128]{1,0:T(1,128)}', space=vmem, size = 0x9000, scoped, tag = 'internal scratch']
  %s0 = inlined_call_operand.vmem [shape: bf16[128,144], index: 0, kind: input, shape index: {}]
  %s1 = inlined_call_operand.vmem [shape: bf16[144,128], index: 1, kind: input, shape index: {}]
  %s2 = inlined_call_operand.vmem [shape: f32[8,128], index: 2, kind: input, shape index: {}]
  %s3 = inlined_call_operand.vmem [shape: f32[128,128], index: 3, kind: output, shape index: {0}]
  %s4 = inlined_call_operand.vmem [shape: f32[16,128], index: 4, kind: output, shape index: {1}]
  %5 = xla_tuple %s3, %s4
  %s6 = sld [smem:[#allocation0]]
  $region53: #{a_call__.17} parent=0
    _
  %s8 = ssub.s32 1, %s6
  %s9 = scalar_select 0, %s8, %s6
  loop: start=0, step=1, limit=4
  $region2: #{a_call__.17} parent=0 // loop_pre_header
    _
  $region3: #{a_call__.17} parent=0 // loop_header
    %s11 = sphi 0, %s15
    %p12 = scmp.ge.s32.totalorder %s11, 4
    %s21 = sphi 0, %s23
    %s24 = sphi 0, %s21
    %s25 = sphi 0, %s24
    %s41 = sphi 0, %s25
    %s45 = sphi 0, %s45
    %s47 = sphi 0, %s45
    %s48 = sphi 0, %s47
    %s62 = sphi 0, %s48
    %s66 = sphi 0, %s66
    %s68 = sphi 0, %s66
    %s69 = sphi 0, %s68
    %s83 = sphi 0, %s69
    %s89 = sphi 0, %s91
    %s92 = sphi 0, %s89
    %s93 = sphi 0, %s92
    %s109 = sphi 0, %s93
    %s115 = sphi 0, %s117
    %s118 = sphi 0, %s115
    %s119 = sphi 0, %s118
    %s135 = sphi 0, %s119
  $region4: #{a_call__.17} parent=0 // loop_header_branch
    %14 = sbr.rel (%p12) target = $region8
  $region5: #{a_call__.17} parent=0 // loop_body
    %s16 = ssub.s32 %s11, 1
    %s17 = ssub.s32 %s11, 2
    %s18 = sadd.s32 %s11, 1
    %s19 = ssub.s32 %s11, %s18
    %p20 = scmp.eq.s32.totalorder %s19, 0
    %s22 = sadd.s32 %s21, 1
    %s23 = scalar_select %p20, %s21, %s22
    %p26 = pneg %p20
    %p27 = scmp.eq.s32.totalorder %s11, 1
    %p28 = por %p26, %p27
    %p29 = scmp.ne.s32.totalorder %s21, %s24
    %p30 = scmp.eq.s32.totalorder %s11, 0
    %p31 = por %p29, %p30
    %p32 = scmp.ne.s32.totalorder %s21, %s24
    %p33 = scmp.eq.s32.totalorder %s16, 1
    %p34 = por %p32, %p33
    %p35 = scmp.ne.s32.totalorder %s24, %s25
    %p36 = scmp.eq.s32.totalorder %s16, 0
    %p37 = por %p35, %p36
    %p38 = scmp.ne.s32.totalorder %s24, %s25
    %p39 = scmp.eq.s32.totalorder %s17, 1
    %p40 = por %p38, %p39
    %p42 = scmp.ne.s32.totalorder %s25, %s41
    %p43 = scmp.eq.s32.totalorder %s17, 0
    %p44 = por %p42, %p43
    %s46 = sadd.s32 %s45, 1
    %p49 = scmp.eq.s32.totalorder %s11, 1
    %p50 = scmp.ne.s32.totalorder %s45, %s47
    %p51 = scmp.eq.s32.totalorder %s11, 0
    %p52 = por %p50, %p51
    %p53 = scmp.ne.s32.totalorder %s45, %s47
    %p54 = scmp.eq.s32.totalorder %s16, 1
    %p55 = por %p53, %p54
    %p56 = scmp.ne.s32.totalorder %s47, %s48
    %p57 = scmp.eq.s32.totalorder %s16, 0
    %p58 = por %p56, %p57
    %p59 = scmp.ne.s32.totalorder %s47, %s48
    %p60 = scmp.eq.s32.totalorder %s17, 1
    %p61 = por %p59, %p60
    %p63 = scmp.ne.s32.totalorder %s48, %s62
    %p64 = scmp.eq.s32.totalorder %s17, 0
    %p65 = por %p63, %p64
    %s67 = sadd.s32 %s66, 1
    %p70 = scmp.eq.s32.totalorder %s11, 1
    %p71 = scmp.ne.s32.totalorder %s66, %s68
    %p72 = scmp.eq.s32.totalorder %s11, 0
    %p73 = por %p71, %p72
    %p74 = scmp.ne.s32.totalorder %s66, %s68
    %p75 = scmp.eq.s32.totalorder %s16, 1
    %p76 = por %p74, %p75
    %p77 = scmp.ne.s32.totalorder %s68, %s69
    %p78 = scmp.eq.s32.totalorder %s16, 0
    %p79 = por %p77, %p78
    %p80 = scmp.ne.s32.totalorder %s68, %s69
    %p81 = scmp.eq.s32.totalorder %s17, 1
    %p82 = por %p80, %p81
    %p84 = scmp.ne.s32.totalorder %s69, %s83
    %p85 = scmp.eq.s32.totalorder %s17, 0
    %p86 = por %p84, %p85
    %s87 = ssub.s32 %s11, %s18
    %p88 = scmp.eq.s32.totalorder %s87, 0
    %s90 = sadd.s32 %s89, 1
    %s91 = scalar_select %p88, %s89, %s90
    %p94 = pneg %p88
    %p95 = scmp.eq.s32.totalorder %s11, 1
    %p96 = por %p94, %p95
    %p97 = scmp.ne.s32.totalorder %s89, %s92
    %p98 = scmp.eq.s32.totalorder %s11, 0
    %p99 = por %p97, %p98
    %p100 = scmp.ne.s32.totalorder %s89, %s92
    %p101 = scmp.eq.s32.totalorder %s16, 1
    %p102 = por %p100, %p101
    %p103 = scmp.ne.s32.totalorder %s92, %s93
    %p104 = scmp.eq.s32.totalorder %s16, 0
    %p105 = por %p103, %p104
    %p106 = scmp.ne.s32.totalorder %s92, %s93
    %p107 = scmp.eq.s32.totalorder %s17, 1
    %p108 = por %p106, %p107
    %p110 = scmp.ne.s32.totalorder %s93, %s109
    %p111 = scmp.eq.s32.totalorder %s17, 0
    %p112 = por %p110, %p111
    %s113 = ssub.s32 %s11, %s18
    %p114 = scmp.eq.s32.totalorder %s113, 0
    %s116 = sadd.s32 %s115, 1
    %s117 = scalar_select %p114, %s115, %s116
    %p120 = pneg %p114
    %p121 = scmp.eq.s32.totalorder %s11, 1
    %p122 = por %p120, %p121
    %p123 = scmp.ne.s32.totalorder %s115, %s118
    %p124 = scmp.eq.s32.totalorder %s11, 0
    %p125 = por %p123, %p124
    %p126 = scmp.ne.s32.totalorder %s115, %s118
    %p127 = scmp.eq.s32.totalorder %s16, 1
    %p128 = por %p126, %p127
    %p129 = scmp.ne.s32.totalorder %s118, %s119
    %p130 = scmp.eq.s32.totalorder %s16, 0
    %p131 = por %p129, %p130
    %p132 = scmp.ne.s32.totalorder %s118, %s119
    %p133 = scmp.eq.s32.totalorder %s17, 1
    %p134 = por %p132, %p133
    %p136 = scmp.ne.s32.totalorder %s119, %s135
    %p137 = scmp.eq.s32.totalorder %s17, 0
    %p138 = por %p136, %p137
    %p139 = scmp.le.s32.totalorder 1, %s11
    %p140 = scmp.lt.s32.totalorder %s11, 3
    %p141 = pnand %p139, %p140
    %p142 = pneg %p141
    // Predicated region
    $region9: #{a_call__.17} parent=5 // pred_check
      _
    $region10: #{a_call__.17} parent=5 // pred_check_branch
      %144 = sbr.rel (%p141) target = $region12
    $region11: #{a_call__.17} parent=5 // pred_region
      %s145 = ssub.s32 %s11, 1
      // Predicated region
      $region13: #{a_call__.17} parent=11 // pred_check
        %p146 = pneg %p58
      $region14: #{a_call__.17} parent=11 // pred_check_branch
        %148 = sbr.rel (%p146) target = $region16
      $region15: #{a_call__.17} parent=11 // pred_region
        _
      $region16: #{a_call__.17} parent=11 // pred_fallthru
        _
      // Predicated region
      $region17: #{a_call__.17} parent=11 // pred_check
        %p149 = pneg %p79
      $region18: #{a_call__.17} parent=11 // pred_check_branch
        %151 = sbr.rel (%p149) target = $region20
      $region19: #{a_call__.17} parent=11 // pred_region
        _
      $region20: #{a_call__.17} parent=11 // pred_fallthru
        _
    $region12: #{a_call__.17} parent=5 // pred_fallthru
      _
    %p152 = scmp.lt.s32.totalorder %s11, 2
    // Predicated region
    $region21: #{a_call__.17} parent=5 // pred_check
      %p153 = pneg %p152
    $region22: #{a_call__.17} parent=5 // pred_check_branch
      %155 = sbr.rel (%p153) target = $region24
    $region23: #{a_call__.17} parent=5 // pred_region
      // Predicated region
      $region25: #{a_call__.17} parent=23 // pred_check
        %p156 = pneg %p31
      $region26: #{a_call__.17} parent=23 // pred_check_branch
        %158 = sbr.rel (%p156) target = $region28
      $region27: #{a_call__.17} parent=23 // pred_region
        %s159 = smul.u32 8, %s11
        %p160 = scmp.lt.s32.totalorder %s159, 15
        %s161 = scalar_select %p160, %s159, 15
        %s162 = smul.addr %s161, 2
        %s163 = smul.addr %s162, 4
        %s164 = scalar_lea.vmem %s0, %s163
        %s165 = smul.u32 8, %s11
      $region28: #{a_call__.17} parent=23 // pred_fallthru
        _
    $region24: #{a_call__.17} parent=5 // pred_fallthru
      _
    %p166 = scmp.le.s32.totalorder 1, %s11
    %p167 = scmp.lt.s32.totalorder %s11, 3
    %p168 = pnand %p166, %p167
    %p169 = pneg %p168
    // Predicated region
    $region29: #{a_call__.17} parent=5 // pred_check
      _
    $region30: #{a_call__.17} parent=5 // pred_check_branch
      %171 = sbr.rel (%p168) target = $region32
    $region31: #{a_call__.17} parent=5 // pred_region
      %s172 = ssub.s32 %s11, 1
      %s173 = smul.u32 8, %s16
      %p174 = scmp.lt.s32.totalorder %s173, 15
      %s175 = scalar_select %p174, %s173, 15
      %s176 = smul.addr %s175, 2
      %s177 = smul.addr %s176, 4
      %s178 = scalar_lea.vmem %s0, %s177
      %p179 = pneg %p37
      %p180 = pneg %p34
      %p181 = pneg %p58
      %p182 = pneg %p55
      %p183 = pneg %p79
      %p184 = pneg %p76
      %p185 = pneg %p105
      %p186 = pneg %p102
      %s187 = smul.u32 8, %s16
      %p188 = scmp.lt.s32.totalorder %s187, 15
      %s189 = scalar_select %p188, %s187, 15
      %s190 = smul.addr %s189, 8
      %s191 = scalar_lea.vmem %s3, %s190
      %p192 = pneg %p131
      %p193 = pneg %p128
      %p194 = scmp.lt.s32.totalorder %s16, 1
      %s195 = scalar_select %p194, %s16, 1
      %s196 = smul.addr %s195, 8
      %s197 = scalar_lea.vmem %s4, %s196
      %s198 = smul.u32 8, %s16
      %p199 = scmp.lt.s32.totalorder %s198, 15
      %s200 = scalar_select %p199, %s198, 15
      %s201 = smul.addr %s200, 2
      %s202 = smul.addr %s201, 4
      %s203 = scalar_lea.vmem %s0, %s202
      %s204 = smul.u32 8, %s16
      %s205 = smul.u32 8, %s16
      %p206 = scmp.lt.s32.totalorder %s205, 15
      %s207 = scalar_select %p206, %s205, 15
      %s208 = smul.addr %s207, 8
      %s209 = scalar_lea.vmem %s3, %s208
      %s210 = smul.u32 8, %s16
      %p211 = scmp.lt.s32.totalorder %s16, 1
      %s212 = scalar_select %p211, %s16, 1
      %s213 = smul.addr %s212, 8
      %s214 = scalar_lea.vmem %s4, %s213
      %v216 = vld [vmem:[%s203] sm:$0xff]
      %v217 = vld [vmem:[%s203 + $0x8] sm:$0xff]
      %v218 = vld [vmem:[%s203 + $0x10] sm:$0xff]
      %v219 = vld [vmem:[%s203 + $0x18] sm:$0xff]
      %v220 = vld [vmem:[%s203 + $0x20] sm:$0xff]
      %v221 = vld [vmem:[%s203 + $0x28] sm:$0xff]
      %v222 = vld [vmem:[%s203 + $0x30] sm:$0xff]
      %v223 = vld [vmem:[%s203 + $0x38] sm:$0xff]
      %v224 = vld [vmem:[%s1] sm:$0xf]
      %v225 = vld [vmem:[%s1 + $0x4] sm:$0xf]
      %v226 = vld [vmem:[%s1 + $0x8] sm:$0xf]
      %v227 = vld [vmem:[%s1 + $0xc] sm:$0xf]
      %v228 = vld [vmem:[%s1 + $0x10] sm:$0xf]
      %v229 = vld [vmem:[%s1 + $0x14] sm:$0xf]
      %v230 = vld [vmem:[%s1 + $0x18] sm:$0xf]
      %v231 = vld [vmem:[%s1 + $0x1c] sm:$0xf]
      %v232 = vld [vmem:[%s1 + $0x20] sm:$0xf]
      %v233 = vld [vmem:[%s1 + $0x24] sm:$0xf]
      %v234 = vld [vmem:[%s1 + $0x28] sm:$0xf]
      %v235 = vld [vmem:[%s1 + $0x2c] sm:$0xf]
      %v236 = vld [vmem:[%s1 + $0x30] sm:$0xf]
      %v237 = vld [vmem:[%s1 + $0x34] sm:$0xf]
      %v238 = vld [vmem:[%s1 + $0x38] sm:$0xf]
      %v239 = vld [vmem:[%s1 + $0x3c] sm:$0xf]
      %v240 = vld [vmem:[%s1 + $0x40] sm:$0xf]
      %v241 = vld [vmem:[%s1 + $0x44] sm:$0xf]
      %v242 = vld [vmem:[%s2] sm:$0xff]
      %v243 = vperm.slane %v242, 0
      %v252 = vunpack.c.l.b16 %v216
      %v253 = vunpack.c.h.b16 %v216
      %v254 = vunpack.c.l.b16 %v217
      %v255 = vunpack.c.h.b16 %v217
      %v256 = vunpack.c.l.b16 %v218
      %v257 = vunpack.c.h.b16 %v218
      %v258 = vunpack.c.l.b16 %v219
      %v259 = vunpack.c.h.b16 %v219
      %v260 = vunpack.c.l.b16 %v220
      %v261 = vunpack.c.h.b16 %v220
      %v262 = vunpack.c.l.b16 %v221
      %v263 = vunpack.c.h.b16 %v221
      %v264 = vunpack.c.l.b16 %v222
      %v265 = vunpack.c.h.b16 %v222
      %v266 = vunpack.c.l.b16 %v223
      %v267 = vunpack.c.h.b16 %v223
      %v268 = vpack.c.b16 %v254, %v252
      %v269 = vpack.c.b16 %v255, %v253
      %v270 = vpack.c.b16 %v258, %v256
      %v271 = vpack.c.b16 %v259, %v257
      %v272 = vpack.c.b16 %v262, %v260
      %v273 = vpack.c.b16 %v263, %v261
      %v274 = vpack.c.b16 %v266, %v264
      %v275 = vpack.c.b16 %v267, %v265
      %v298 = vunpack.c.l.b16 %v224
      %v299 = vunpack.c.l.b16 %v225
      %v300 = vunpack.c.l.b16 %v226
      %v301 = vunpack.c.l.b16 %v227
      %v302 = vunpack.c.l.b16 %v228
      %v303 = vunpack.c.l.b16 %v229
      %v304 = vunpack.c.l.b16 %v230
      %v305 = vunpack.c.l.b16 %v231
      %v306 = vunpack.c.l.b16 %v232
      %v307 = vunpack.c.l.b16 %v233
      %v308 = vunpack.c.l.b16 %v234
      %v309 = vunpack.c.l.b16 %v235
      %v310 = vunpack.c.l.b16 %v236
      %v311 = vunpack.c.l.b16 %v237
      %v312 = vunpack.c.l.b16 %v238
      %v313 = vunpack.c.l.b16 %v239
      %v314 = vunpack.c.l.b16 %v240
      %v315 = vunpack.c.l.b16 %v241
      %v316 = vpack.c.b16 %v299, %v298
      %v317 = vpack.c.b16 %v301, %v300
      %v318 = vpack.c.b16 %v303, %v302
      %v319 = vpack.c.b16 %v305, %v304
      %v320 = vpack.c.b16 %v307, %v306
      %v321 = vpack.c.b16 %v309, %v308
      %v322 = vpack.c.b16 %v311, %v310
      %v323 = vpack.c.b16 %v313, %v312
      %v324 = vpack.c.b16 %v315, %v314
      %vm334 = vcmask 130048
      %v336 = vsel %vm334, %v269, 0
      %v339 = vsel %vm334, %v271, 0
      %v342 = vsel %vm334, %v273, 0
      %v345 = vsel %vm334, %v275, 0
      %347 = vmatpush.bf16.msra.mxu0 %v323
      %348 = vmatpush.bf16.msra.mxu0 %v322
      %349 = vmatpush.bf16.msra.mxu0 %v321
      %350 = vmatpush.bf16.msra.mxu0 %v320
      %351 = vmatpush.bf16.msra.mxu0 %v319
      %352 = vmatpush.bf16.msra.mxu0 %v318
      %353 = vmatpush.bf16.msra.mxu0 %v317
      %354 = vmatpush.bf16.msra.mxu0 %v316
      %355 = vmatmul.bf16.gmra.mxu0 %v268
      %v356 = vpop.f32.mrf.mxu0
      %v357 = vadd.f32 %v243, %v356
      %v358 = vpop.f32.mrf.mxu0
      %v359 = vadd.f32 %v243, %v358
      %360 = vmatmul.bf16.gmra.mxu0 %v270
      %v361 = vpop.f32.mrf.mxu0
      %v362 = vadd.f32 %v243, %v361
      %v363 = vpop.f32.mrf.mxu0
      %v364 = vadd.f32 %v243, %v363
      %365 = vmatmul.bf16.gmra.mxu0 %v272
      %v366 = vpop.f32.mrf.mxu0
      %v367 = vadd.f32 %v243, %v366
      %v368 = vpop.f32.mrf.mxu0
      %v369 = vadd.f32 %v243, %v368
      %370 = vmatmul.bf16.gmra.mxu0 %v274
      %v371 = vpop.f32.mrf.mxu0
      %v372 = vadd.f32 %v243, %v371
      %v373 = vpop.f32.mrf.mxu0
      %v374 = vadd.f32 %v243, %v373
      %375 = vdwg.mxu0
      %376 = vmatpush.bf16.msra.mxu0 0
      %377 = vmatpush.bf16.msra.mxu0 0
      %378 = vmatpush.bf16.msra.mxu0 0
      %379 = vmatpush.bf16.msra.mxu0 0
      %380 = vmatpush.bf16.msra.mxu0 0
      %381 = vmatpush.bf16.msra.mxu0 0
      %382 = vmatpush.bf16.msra.mxu0 0
      %383 = vmatpush.bf16.msra.mxu0 %v324
      %384 = vmatmul.bf16.gmra.mxu0 %v336
      %v385 = vpop.f32.mrf.mxu0
      %v386 = vadd.f32 %v357, %v385
      %v387 = vpop.f32.mrf.mxu0
      %v388 = vadd.f32 %v359, %v387
      %389 = vmatmul.bf16.gmra.mxu0 %v339
      %v390 = vpop.f32.mrf.mxu0
      %v391 = vadd.f32 %v362, %v390
      %v392 = vpop.f32.mrf.mxu0
      %v393 = vadd.f32 %v364, %v392
      %394 = vmatmul.bf16.gmra.mxu0 %v342
      %v395 = vpop.f32.mrf.mxu0
      %v396 = vadd.f32 %v367, %v395
      %v397 = vpop.f32.mrf.mxu0
      %v398 = vadd.f32 %v369, %v397
      %399 = vmatmul.bf16.gmra.mxu0 %v345
      %v400 = vpop.f32.mrf.mxu0
      %v401 = vadd.f32 %v372, %v400
      %v402 = vpop.f32.mrf.mxu0
      %v403 = vadd.f32 %v374, %v402
      %404 = vdwg.mxu0
      %v405 = vadd.f32 %v386, %v388
      %v406 = vadd.f32 %v405, %v391
      %v407 = vadd.f32 %v406, %v393
      %v408 = vadd.f32 %v407, %v396
      %v409 = vadd.f32 %v408, %v398
      %v410 = vadd.f32 %v409, %v401
      %v411 = vadd.f32 %v410, %v403
      %v412 = vrot.slane %v411, 4
      %v413 = vadd.f32 %v411, %v412
      %v414 = vrot.slane %v413, 2
      %v415 = vadd.f32 %v413, %v414
      %v416 = vrot.slane %v415, 1
      %v417 = vadd.f32 %v415, %v416
      %v418 = vmul.f32 %v386, %v386
      %v419 = vmul.f32 %v388, %v388
      %v420 = vmul.f32 %v391, %v391
      %v421 = vmul.f32 %v393, %v393
      %v422 = vmul.f32 %v396, %v396
      %v423 = vmul.f32 %v398, %v398
      %v424 = vmul.f32 %v401, %v401
      %v425 = vmul.f32 %v403, %v403
      %v426 = vadd.f32 %v418, %v419
      %v427 = vadd.f32 %v426, %v420
      %v428 = vadd.f32 %v427, %v421
      %v429 = vadd.f32 %v428, %v422
      %v430 = vadd.f32 %v429, %v423
      %v431 = vadd.f32 %v430, %v424
      %v432 = vadd.f32 %v431, %v425
      %v433 = vrot.slane %v432, 4
      %v434 = vadd.f32 %v432, %v433
      %v435 = vrot.slane %v434, 2
      %v436 = vadd.f32 %v434, %v435
      %v437 = vrot.slane %v436, 1
      %v438 = vadd.f32 %v436, %v437
      %v439 = vlaneseq
      %v440 = vshrl.u32 %v439, 7
      %vm441 = vcmp.eq.s32.totalorder %v440, 0
      %vm442 = vcmp.eq.s32.totalorder %v440, 1
      %v443 = vsel %vm442, 1, 0
      %vm444 = vcmp.eq.s32.totalorder %v443, 1
      %v445 = vsel %vm444, %v438, 0.0
      %v446 = vsel %vm441, 1, 0
      %vm447 = vcmp.eq.s32.totalorder %v446, 1
      %v448 = vsel %vm447, %v417, %v445
      %449 = vst [vmem:[%s214] sm:$0xff] %v448
      %450 = vst [vmem:[%s209] sm:$0xff] %v386
      %451 = vst [vmem:[%s209 + $0x8] sm:$0xff] %v388
      %452 = vst [vmem:[%s209 + $0x10] sm:$0xff] %v391
      %453 = vst [vmem:[%s209 + $0x18] sm:$0xff] %v393
      %454 = vst [vmem:[%s209 + $0x20] sm:$0xff] %v396
      %455 = vst [vmem:[%s209 + $0x28] sm:$0xff] %v398
      %456 = vst [vmem:[%s209 + $0x30] sm:$0xff] %v401
      %457 = vst [vmem:[%s209 + $0x38] sm:$0xff] %v403
      %s458 = smul.u32 8, %s16
      %p459 = scmp.lt.s32.totalorder %s458, 15
      %s460 = scalar_select %p459, %s458, 15
      %s461 = smul.addr %s460, 8
      %s462 = scalar_lea.vmem %s3, %s461
      %p463 = scmp.lt.s32.totalorder %s16, 1
      %s464 = scalar_select %p463, %s16, 1
      %s465 = smul.addr %s464, 8
      %s466 = scalar_lea.vmem %s4, %s465
      // Predicated region
      $region33: #{a_call__.17} parent=31 // pred_check
        %p467 = pneg %p102
      $region34: #{a_call__.17} parent=31 // pred_check_branch
        %469 = sbr.rel (%p467) target = $region36
      $region35: #{a_call__.17} parent=31 // pred_region
        %s470 = smul.u32 8, %s16
      $region36: #{a_call__.17} parent=31 // pred_fallthru
        _
      // Predicated region
      $region37: #{a_call__.17} parent=31 // pred_check
        %p471 = pneg %p128
      $region38: #{a_call__.17} parent=31 // pred_check_branch
        %473 = sbr.rel (%p471) target = $region40
      $region39: #{a_call__.17} parent=31 // pred_region
        _
      $region40: #{a_call__.17} parent=31 // pred_fallthru
        _
    $region32: #{a_call__.17} parent=5 // pred_fallthru
      _
    %p474 = scmp.le.s32.totalorder 2, %s11
    // Predicated region
    $region41: #{a_call__.17} parent=5 // pred_check
      %p475 = pneg %p474
    $region42: #{a_call__.17} parent=5 // pred_check_branch
      %477 = sbr.rel (%p475) target = $region44
    $region43: #{a_call__.17} parent=5 // pred_region
      %s478 = ssub.s32 %s11, 2
      // Predicated region
      $region45: #{a_call__.17} parent=43 // pred_check
        %p479 = pneg %p108
      $region46: #{a_call__.17} parent=43 // pred_check_branch
        %481 = sbr.rel (%p479) target = $region48
      $region47: #{a_call__.17} parent=43 // pred_region
        %s482 = smul.u32 8, %s17
        %p483 = scmp.lt.s32.totalorder %s482, 15
        %s484 = scalar_select %p483, %s482, 15
        %s485 = smul.addr %s484, 8
        %s486 = scalar_lea.vmem %s3, %s485
      $region48: #{a_call__.17} parent=43 // pred_fallthru
        _
      // Predicated region
      $region49: #{a_call__.17} parent=43 // pred_check
        %p487 = pneg %p134
      $region50: #{a_call__.17} parent=43 // pred_check_branch
        %489 = sbr.rel (%p487) target = $region52
      $region51: #{a_call__.17} parent=43 // pred_region
        %p490 = scmp.lt.s32.totalorder %s17, 1
        %s491 = scalar_select %p490, %s17, 1
        %s492 = smul.addr %s491, 8
        %s493 = scalar_lea.vmem %s4, %s492
      $region52: #{a_call__.17} parent=43 // pred_fallthru
        _
    $region44: #{a_call__.17} parent=5 // pred_fallthru
      _
  $region6: #{a_call__.17} parent=0 // loop_footer
    %s15 = sadd.s32 1, %s11
  $region7: #{a_call__.17} parent=0 // loop_footer_branch
    %10 = sbr.rel target = $region3
  $region8: #{a_call__.17} parent=0 // loop_exit
    _

// kernel: tile.33
$region0: #{tile.33}
  #allocation0 [shape = 's32[1]{0}', space=sflag, size = 0x4, scoped, tag = 'scoped memory for tile.33']
  %s0 = inlined_call_operand.vmem [shape: f32[4], index: 0, kind: input, shape index: {}]
  %s1 = inlined_call_operand.vmem [shape: f32[4,4], index: 1, kind: output, shape index: {}]
  // Predicated region
  $region2: #{tile.33} parent=0 // pred_check
    _
  $region3: #{tile.33} parent=0 // pred_check_branch
    %3 = sbr.rel (0) target = $region5
  $region4: #{tile.33} parent=0 // pred_region
    _
  $region5: #{tile.33} parent=0 // pred_fallthru
    _
  %v4 = vld [vmem:[%s0] ss:$0 sm:$0xff]
  %5 = vst [vmem:[%s1] sm:$0xf] %v4

// kernel: tile.34
$region0: #{tile.34}
  %s0 = inlined_call_operand.vmem [shape: f32[4,4], index: 0, kind: input, shape index: {}]
  %s1 = inlined_call_operand.vmem [shape: f32[16], index: 1, kind: output, shape index: {}]
  $region1: #{tile.34} parent=0
    #allocation0 [shape = 'u8[4096]{0}', space=vmem, size = 0x1000, scoped, tag = 'scoped mem for output reshape']
    #allocation1 [shape = 'u8[4096]{0}', space=vmem, size = 0x1000, scoped, tag = 'scoped mem for input reshape']
    %s3 = ssub.s32 16, 1
    %v4 = vld [vmem:[%s0] sm:%s3]
    %5 = vst [vmem:[#allocation1] sm:%s3] %v4
    %v6 = vld [vmem:[#allocation1] sm:$0x1]
    %vm7 = vcmask 31744
    %8 = vst.msk [vmem:[#allocation0] sm:$0x1] %vm7, %v6
    %s9 = scalar_lea.vmem [#allocation1], 3
    %v10 = vld [vmem:[%s9] sm:$0x1]
    %11 = vrot.lane.b32.xlu0 %v10, 12
    %v12 = vpop.permute.xlu0 %11
    %vm13 = vcmask 130144
    %14 = vst.msk [vmem:[#allocation0] sm:$0x1] %vm13, %v12
    %s15 = scalar_lea.vmem [#allocation1], 2
    %v16 = vld [vmem:[%s15] sm:$0x1]
    %17 = vrot.lane.b32.xlu0 %v16, 8
    %v18 = vpop.permute.xlu0 %17
    %vm19 = vcmask 97344
    %20 = vst.msk [vmem:[#allocation0] sm:$0x1] %vm19, %v18
    %s21 = scalar_lea.vmem [#allocation1], 1
    %v22 = vld [vmem:[%s21] sm:$0x1]
    %23 = vrot.lane.b32.xlu0 %v22, 4
    %v24 = vpop.permute.xlu0 %23
    %vm25 = vcmask 64544
    %26 = vst.msk [vmem:[#allocation0] sm:$0x1] %vm25, %v24
    %s28 = ssub.s32 2, 1
    %v29 = vld [vmem:[#allocation0] sm:%s28]
    %s31 = ssub.s32 2, 1
    %32 = vst [vmem:[%s1] sm:%s31] %v29

// kernel: a_call__.19
$region0: #{a_call__.19}
  #allocation0 [shape = 'u32[]', space=smem, size = 0x4, offset = 0x4, fixed_abs, tag = 'smem constant byte address 0x4 - core index']
  #allocation1 [shape = 'u32[72,128]{1,0:T(1,128)}', space=vmem, size = 0x9000, scoped, tag = 'internal scratch']
  %s0 = inlined_call_operand.vmem [shape: bf16[128,72], index: 0, kind: input, shape index: {}]
  %s1 = inlined_call_operand.vmem [shape: bf16[72,128], index: 1, kind: input, shape index: {}]
  %s2 = inlined_call_operand.vmem [shape: f32[8,128], index: 2, kind: input, shape index: {}]
  %s3 = inlined_call_operand.vmem [shape: f32[128,128], index: 3, kind: output, shape index: {0}]
  %s4 = inlined_call_operand.vmem [shape: f32[16,128], index: 4, kind: output, shape index: {1}]
  %5 = xla_tuple %s3, %s4
  %s6 = sld [smem:[#allocation0]]
  $region53: #{a_call__.19} parent=0
    _
  %s8 = ssub.s32 1, %s6
  %s9 = scalar_select 0, %s8, %s6
  loop: start=0, step=1, limit=4
  $region2: #{a_call__.19} parent=0 // loop_pre_header
    _
  $region3: #{a_call__.19} parent=0 // loop_header
    %s11 = sphi 0, %s15
    %p12 = scmp.ge.s32.totalorder %s11, 4
    %s21 = sphi 0, %s23
    %s24 = sphi 0, %s21
    %s25 = sphi 0, %s24
    %s41 = sphi 0, %s25
    %s45 = sphi 0, %s45
    %s47 = sphi 0, %s45
    %s48 = sphi 0, %s47
    %s62 = sphi 0, %s48
    %s66 = sphi 0, %s66
    %s68 = sphi 0, %s66
    %s69 = sphi 0, %s68
    %s83 = sphi 0, %s69
    %s89 = sphi 0, %s91
    %s92 = sphi 0, %s89
    %s93 = sphi 0, %s92
    %s109 = sphi 0, %s93
    %s115 = sphi 0, %s117
    %s118 = sphi 0, %s115
    %s119 = sphi 0, %s118
    %s135 = sphi 0, %s119
  $region4: #{a_call__.19} parent=0 // loop_header_branch
    %14 = sbr.rel (%p12) target = $region8
  $region5: #{a_call__.19} parent=0 // loop_body
    %s16 = ssub.s32 %s11, 1
    %s17 = ssub.s32 %s11, 2
    %s18 = sadd.s32 %s11, 1
    %s19 = ssub.s32 %s11, %s18
    %p20 = scmp.eq.s32.totalorder %s19, 0
    %s22 = sadd.s32 %s21, 1
    %s23 = scalar_select %p20, %s21, %s22
    %p26 = pneg %p20
    %p27 = scmp.eq.s32.totalorder %s11, 1
    %p28 = por %p26, %p27
    %p29 = scmp.ne.s32.totalorder %s21, %s24
    %p30 = scmp.eq.s32.totalorder %s11, 0
    %p31 = por %p29, %p30
    %p32 = scmp.ne.s32.totalorder %s21, %s24
    %p33 = scmp.eq.s32.totalorder %s16, 1
    %p34 = por %p32, %p33
    %p35 = scmp.ne.s32.totalorder %s24, %s25
    %p36 = scmp.eq.s32.totalorder %s16, 0
    %p37 = por %p35, %p36
    %p38 = scmp.ne.s32.totalorder %s24, %s25
    %p39 = scmp.eq.s32.totalorder %s17, 1
    %p40 = por %p38, %p39
    %p42 = scmp.ne.s32.totalorder %s25, %s41
    %p43 = scmp.eq.s32.totalorder %s17, 0
    %p44 = por %p42, %p43
    %s46 = sadd.s32 %s45, 1
    %p49 = scmp.eq.s32.totalorder %s11, 1
    %p50 = scmp.ne.s32.totalorder %s45, %s47
    %p51 = scmp.eq.s32.totalorder %s11, 0
    %p52 = por %p50, %p51
    %p53 = scmp.ne.s32.totalorder %s45, %s47
    %p54 = scmp.eq.s32.totalorder %s16, 1
    %p55 = por %p53, %p54
    %p56 = scmp.ne.s32.totalorder %s47, %s48
    %p57 = scmp.eq.s32.totalorder %s16, 0
    %p58 = por %p56, %p57
    %p59 = scmp.ne.s32.totalorder %s47, %s48
    %p60 = scmp.eq.s32.totalorder %s17, 1
    %p61 = por %p59, %p60
    %p63 = scmp.ne.s32.totalorder %s48, %s62
    %p64 = scmp.eq.s32.totalorder %s17, 0
    %p65 = por %p63, %p64
    %s67 = sadd.s32 %s66, 1
    %p70 = scmp.eq.s32.totalorder %s11, 1
    %p71 = scmp.ne.s32.totalorder %s66, %s68
    %p72 = scmp.eq.s32.totalorder %s11, 0
    %p73 = por %p71, %p72
    %p74 = scmp.ne.s32.totalorder %s66, %s68
    %p75 = scmp.eq.s32.totalorder %s16, 1
    %p76 = por %p74, %p75
    %p77 = scmp.ne.s32.totalorder %s68, %s69
    %p78 = scmp.eq.s32.totalorder %s16, 0
    %p79 = por %p77, %p78
    %p80 = scmp.ne.s32.totalorder %s68, %s69
    %p81 = scmp.eq.s32.totalorder %s17, 1
    %p82 = por %p80, %p81
    %p84 = scmp.ne.s32.totalorder %s69, %s83
    %p85 = scmp.eq.s32.totalorder %s17, 0
    %p86 = por %p84, %p85
    %s87 = ssub.s32 %s11, %s18
    %p88 = scmp.eq.s32.totalorder %s87, 0
    %s90 = sadd.s32 %s89, 1
    %s91 = scalar_select %p88, %s89, %s90
    %p94 = pneg %p88
    %p95 = scmp.eq.s32.totalorder %s11, 1
    %p96 = por %p94, %p95
    %p97 = scmp.ne.s32.totalorder %s89, %s92
    %p98 = scmp.eq.s32.totalorder %s11, 0
    %p99 = por %p97, %p98
    %p100 = scmp.ne.s32.totalorder %s89, %s92
    %p101 = scmp.eq.s32.totalorder %s16, 1
    %p102 = por %p100, %p101
    %p103 = scmp.ne.s32.totalorder %s92, %s93
    %p104 = scmp.eq.s32.totalorder %s16, 0
    %p105 = por %p103, %p104
    %p106 = scmp.ne.s32.totalorder %s92, %s93
    %p107 = scmp.eq.s32.totalorder %s17, 1
    %p108 = por %p106, %p107
    %p110 = scmp.ne.s32.totalorder %s93, %s109
    %p111 = scmp.eq.s32.totalorder %s17, 0
    %p112 = por %p110, %p111
    %s113 = ssub.s32 %s11, %s18
    %p114 = scmp.eq.s32.totalorder %s113, 0
    %s116 = sadd.s32 %s115, 1
    %s117 = scalar_select %p114, %s115, %s116
    %p120 = pneg %p114
    %p121 = scmp.eq.s32.totalorder %s11, 1
    %p122 = por %p120, %p121
    %p123 = scmp.ne.s32.totalorder %s115, %s118
    %p124 = scmp.eq.s32.totalorder %s11, 0
    %p125 = por %p123, %p124
    %p126 = scmp.ne.s32.totalorder %s115, %s118
    %p127 = scmp.eq.s32.totalorder %s16, 1
    %p128 = por %p126, %p127
    %p129 = scmp.ne.s32.totalorder %s118, %s119
    %p130 = scmp.eq.s32.totalorder %s16, 0
    %p131 = por %p129, %p130
    %p132 = scmp.ne.s32.totalorder %s118, %s119
    %p133 = scmp.eq.s32.totalorder %s17, 1
    %p134 = por %p132, %p133
    %p136 = scmp.ne.s32.totalorder %s119, %s135
    %p137 = scmp.eq.s32.totalorder %s17, 0
    %p138 = por %p136, %p137
    %p139 = scmp.le.s32.totalorder 1, %s11
    %p140 = scmp.lt.s32.totalorder %s11, 3
    %p141 = pnand %p139, %p140
    %p142 = pneg %p141
    // Predicated region
    $region9: #{a_call__.19} parent=5 // pred_check
      _
    $region10: #{a_call__.19} parent=5 // pred_check_branch
      %144 = sbr.rel (%p141) target = $region12
    $region11: #{a_call__.19} parent=5 // pred_region
      %s145 = ssub.s32 %s11, 1
      // Predicated region
      $region13: #{a_call__.19} parent=11 // pred_check
        %p146 = pneg %p58
      $region14: #{a_call__.19} parent=11 // pred_check_branch
        %148 = sbr.rel (%p146) target = $region16
      $region15: #{a_call__.19} parent=11 // pred_region
        _
      $region16: #{a_call__.19} parent=11 // pred_fallthru
        _
      // Predicated region
      $region17: #{a_call__.19} parent=11 // pred_check
        %p149 = pneg %p79
      $region18: #{a_call__.19} parent=11 // pred_check_branch
        %151 = sbr.rel (%p149) target = $region20
      $region19: #{a_call__.19} parent=11 // pred_region
        _
      $region20: #{a_call__.19} parent=11 // pred_fallthru
        _
    $region12: #{a_call__.19} parent=5 // pred_fallthru
      _
    %p152 = scmp.lt.s32.totalorder %s11, 2
    // Predicated region
    $region21: #{a_call__.19} parent=5 // pred_check
      %p153 = pneg %p152
    $region22: #{a_call__.19} parent=5 // pred_check_branch
      %155 = sbr.rel (%p153) target = $region24
    $region23: #{a_call__.19} parent=5 // pred_region
      // Predicated region
      $region25: #{a_call__.19} parent=23 // pred_check
        %p156 = pneg %p31
      $region26: #{a_call__.19} parent=23 // pred_check_branch
        %158 = sbr.rel (%p156) target = $region28
      $region27: #{a_call__.19} parent=23 // pred_region
        %s159 = smul.u32 8, %s11
        %p160 = scmp.lt.s32.totalorder %s159, 15
        %s161 = scalar_select %p160, %s159, 15
        %s162 = smul.addr %s161, 4
        %s163 = scalar_lea.vmem %s0, %s162
        %s164 = smul.u32 8, %s11
      $region28: #{a_call__.19} parent=23 // pred_fallthru
        _
    $region24: #{a_call__.19} parent=5 // pred_fallthru
      _
    %p165 = scmp.le.s32.totalorder 1, %s11
    %p166 = scmp.lt.s32.totalorder %s11, 3
    %p167 = pnand %p165, %p166
    %p168 = pneg %p167
    // Predicated region
    $region29: #{a_call__.19} parent=5 // pred_check
      _
    $region30: #{a_call__.19} parent=5 // pred_check_branch
      %170 = sbr.rel (%p167) target = $region32
    $region31: #{a_call__.19} parent=5 // pred_region
      %s171 = ssub.s32 %s11, 1
      %s172 = smul.u32 8, %s16
      %p173 = scmp.lt.s32.totalorder %s172, 15
      %s174 = scalar_select %p173, %s172, 15
      %s175 = smul.addr %s174, 4
      %s176 = scalar_lea.vmem %s0, %s175
      %p177 = pneg %p37
      %p178 = pneg %p34
      %p179 = pneg %p58
      %p180 = pneg %p55
      %p181 = pneg %p79
      %p182 = pneg %p76
      %p183 = pneg %p105
      %p184 = pneg %p102
      %s185 = smul.u32 8, %s16
      %p186 = scmp.lt.s32.totalorder %s185, 15
      %s187 = scalar_select %p186, %s185, 15
      %s188 = smul.addr %s187, 8
      %s189 = scalar_lea.vmem %s3, %s188
      %p190 = pneg %p131
      %p191 = pneg %p128
      %p192 = scmp.lt.s32.totalorder %s16, 1
      %s193 = scalar_select %p192, %s16, 1
      %s194 = smul.addr %s193, 8
      %s195 = scalar_lea.vmem %s4, %s194
      %s196 = smul.u32 8, %s16
      %p197 = scmp.lt.s32.totalorder %s196, 15
      %s198 = scalar_select %p197, %s196, 15
      %s199 = smul.addr %s198, 4
      %s200 = scalar_lea.vmem %s0, %s199
      %s201 = smul.u32 8, %s16
      %s202 = smul.u32 8, %s16
      %p203 = scmp.lt.s32.totalorder %s202, 15
      %s204 = scalar_select %p203, %s202, 15
      %s205 = smul.addr %s204, 8
      %s206 = scalar_lea.vmem %s3, %s205
      %s207 = smul.u32 8, %s16
      %p208 = scmp.lt.s32.totalorder %s16, 1
      %s209 = scalar_select %p208, %s16, 1
      %s210 = smul.addr %s209, 8
      %s211 = scalar_lea.vmem %s4, %s210
      %v213 = vld [vmem:[%s200] sm:$0xf]
      %v214 = vld [vmem:[%s200 + $0x4] sm:$0xf]
      %v215 = vld [vmem:[%s200 + $0x8] sm:$0xf]
      %v216 = vld [vmem:[%s200 + $0xc] sm:$0xf]
      %v217 = vld [vmem:[%s200 + $0x10] sm:$0xf]
      %v218 = vld [vmem:[%s200 + $0x14] sm:$0xf]
      %v219 = vld [vmem:[%s200 + $0x18] sm:$0xf]
      %v220 = vld [vmem:[%s200 + $0x1c] sm:$0xf]
      %v221 = vld [vmem:[%s1] sm:$0xf]
      %v222 = vld [vmem:[%s1 + $0x4] sm:$0xf]
      %v223 = vld [vmem:[%s1 + $0x8] sm:$0xf]
      %v224 = vld [vmem:[%s1 + $0xc] sm:$0xf]
      %v225 = vld [vmem:[%s1 + $0x10] sm:$0xf]
      %v226 = vld [vmem:[%s1 + $0x14] sm:$0xf]
      %v227 = vld [vmem:[%s1 + $0x18] sm:$0xf]
      %v228 = vld [vmem:[%s1 + $0x1c] sm:$0xf]
      %v229 = vld [vmem:[%s1 + $0x20] sm:$0xf]
      %v230 = vld [vmem:[%s2] sm:$0xff]
      %v231 = vperm.slane %v230, 0
      %v240 = vunpack.c.l.b16 %v213
      %v241 = vunpack.c.l.b16 %v214
      %v242 = vunpack.c.l.b16 %v215
      %v243 = vunpack.c.l.b16 %v216
      %v244 = vunpack.c.l.b16 %v217
      %v245 = vunpack.c.l.b16 %v218
      %v246 = vunpack.c.l.b16 %v219
      %v247 = vunpack.c.l.b16 %v220
      %v248 = vpack.c.b16 %v241, %v240
      %v249 = vpack.c.b16 %v243, %v242
      %v250 = vpack.c.b16 %v245, %v244
      %v251 = vpack.c.b16 %v247, %v246
      %v261 = vunpack.c.l.b16 %v221
      %v262 = vunpack.c.l.b16 %v222
      %v263 = vunpack.c.l.b16 %v223
      %v264 = vunpack.c.l.b16 %v224
      %v265 = vunpack.c.l.b16 %v225
      %v266 = vunpack.c.l.b16 %v226
      %v267 = vunpack.c.l.b16 %v227
      %v268 = vunpack.c.l.b16 %v228
      %v269 = vunpack.c.l.b16 %v229
      %v270 = vpack.c.b16 %v262, %v261
      %v271 = vpack.c.b16 %v264, %v263
      %v272 = vpack.c.b16 %v266, %v265
      %v273 = vpack.c.b16 %v268, %v267
      %v274 = vpack.c.b16 %v269, %v269
      %vm279 = vcmask 588800
      %v281 = vsel %vm279, %v248, 0
      %v284 = vsel %vm279, %v249, 0
      %v287 = vsel %vm279, %v250, 0
      %v290 = vsel %vm279, %v251, 0
      %vm292 = vcmask 1043456
      %v294 = vsel %vm292, %v274, 0
      %296 = vmatpush.bf16.msra.mxu0 0
      %297 = vmatpush.bf16.msra.mxu0 0
      %298 = vmatpush.bf16.msra.mxu0 0
      %299 = vmatpush.bf16.msra.mxu0 %v294
      %300 = vmatpush.bf16.msra.mxu0 %v273
      %301 = vmatpush.bf16.msra.mxu0 %v272
      %302 = vmatpush.bf16.msra.mxu0 %v271
      %303 = vmatpush.bf16.msra.mxu0 %v270
      %304 = vmatmul.bf16.gmra.mxu0 %v281
      %v305 = vpop.f32.mrf.mxu0
      %v306 = vadd.f32 %v231, %v305
      %v307 = vpop.f32.mrf.mxu0
      %v308 = vadd.f32 %v231, %v307
      %309 = vmatmul.bf16.gmra.mxu0 %v284
      %v310 = vpop.f32.mrf.mxu0
      %v311 = vadd.f32 %v231, %v310
      %v312 = vpop.f32.mrf.mxu0
      %v313 = vadd.f32 %v231, %v312
      %314 = vmatmul.bf16.gmra.mxu0 %v287
      %v315 = vpop.f32.mrf.mxu0
      %v316 = vadd.f32 %v231, %v315
      %v317 = vpop.f32.mrf.mxu0
      %v318 = vadd.f32 %v231, %v317
      %319 = vmatmul.bf16.gmra.mxu0 %v290
      %v320 = vpop.f32.mrf.mxu0
      %v321 = vadd.f32 %v231, %v320
      %v322 = vpop.f32.mrf.mxu0
      %v323 = vadd.f32 %v231, %v322
      %324 = vdwg.mxu0
      %v325 = vadd.f32 %v306, %v308
      %v326 = vadd.f32 %v325, %v311
      %v327 = vadd.f32 %v326, %v313
      %v328 = vadd.f32 %v327, %v316
      %v329 = vadd.f32 %v328, %v318
      %v330 = vadd.f32 %v329, %v321
      %v331 = vadd.f32 %v330, %v323
      %v332 = vrot.slane %v331, 4
      %v333 = vadd.f32 %v331, %v332
      %v334 = vrot.slane %v333, 2
      %v335 = vadd.f32 %v333, %v334
      %v336 = vrot.slane %v335, 1
      %v337 = vadd.f32 %v335, %v336
      %v338 = vmul.f32 %v306, %v306
      %v339 = vmul.f32 %v308, %v308
      %v340 = vmul.f32 %v311, %v311
      %v341 = vmul.f32 %v313, %v313
      %v342 = vmul.f32 %v316, %v316
      %v343 = vmul.f32 %v318, %v318
      %v344 = vmul.f32 %v321, %v321
      %v345 = vmul.f32 %v323, %v323
      %v346 = vadd.f32 %v338, %v339
      %v347 = vadd.f32 %v346, %v340
      %v348 = vadd.f32 %v347, %v341
      %v349 = vadd.f32 %v348, %v342
      %v350 = vadd.f32 %v349, %v343
      %v351 = vadd.f32 %v350, %v344
      %v352 = vadd.f32 %v351, %v345
      %v353 = vrot.slane %v352, 4
      %v354 = vadd.f32 %v352, %v353
      %v355 = vrot.slane %v354, 2
      %v356 = vadd.f32 %v354, %v355
      %v357 = vrot.slane %v356, 1
      %v358 = vadd.f32 %v356, %v357
      %v359 = vlaneseq
      %v360 = vshrl.u32 %v359, 7
      %vm361 = vcmp.eq.s32.totalorder %v360, 0
      %vm362 = vcmp.eq.s32.totalorder %v360, 1
      %v363 = vsel %vm362, 1, 0
      %vm364 = vcmp.eq.s32.totalorder %v363, 1
      %v365 = vsel %vm364, %v358, 0.0
      %v366 = vsel %vm361, 1, 0
      %vm367 = vcmp.eq.s32.totalorder %v366, 1
      %v368 = vsel %vm367, %v337, %v365
      %369 = vst [vmem:[%s211] sm:$0xff] %v368
      %370 = vst [vmem:[%s206] sm:$0xff] %v306
      %371 = vst [vmem:[%s206 + $0x8] sm:$0xff] %v308
      %372 = vst [vmem:[%s206 + $0x10] sm:$0xff] %v311
      %373 = vst [vmem:[%s206 + $0x18] sm:$0xff] %v313
      %374 = vst [vmem:[%s206 + $0x20] sm:$0xff] %v316
      %375 = vst [vmem:[%s206 + $0x28] sm:$0xff] %v318
      %376 = vst [vmem:[%s206 + $0x30] sm:$0xff] %v321
      %377 = vst [vmem:[%s206 + $0x38] sm:$0xff] %v323
      %s378 = smul.u32 8, %s16
      %p379 = scmp.lt.s32.totalorder %s378, 15
      %s380 = scalar_select %p379, %s378, 15
      %s381 = smul.addr %s380, 8
      %s382 = scalar_lea.vmem %s3, %s381
      %p383 = scmp.lt.s32.totalorder %s16, 1
      %s384 = scalar_select %p383, %s16, 1
      %s385 = smul.addr %s384, 8
      %s386 = scalar_lea.vmem %s4, %s385
      // Predicated region
      $region33: #{a_call__.19} parent=31 // pred_check
        %p387 = pneg %p102
      $region34: #{a_call__.19} parent=31 // pred_check_branch
        %389 = sbr.rel (%p387) target = $region36
      $region35: #{a_call__.19} parent=31 // pred_region
        %s390 = smul.u32 8, %s16
      $region36: #{a_call__.19} parent=31 // pred_fallthru
        _
      // Predicated region
      $region37: #{a_call__.19} parent=31 // pred_check
        %p391 = pneg %p128
      $region38: #{a_call__.19} parent=31 // pred_check_branch
        %393 = sbr.rel (%p391) target = $region40
      $region39: #{a_call__.19} parent=31 // pred_region
        _
      $region40: #{a_call__.19} parent=31 // pred_fallthru
        _
    $region32: #{a_call__.19} parent=5 // pred_fallthru
      _
    %p394 = scmp.le.s32.totalorder 2, %s11
    // Predicated region
    $region41: #{a_call__.19} parent=5 // pred_check
      %p395 = pneg %p394
    $region42: #{a_call__.19} parent=5 // pred_check_branch
      %397 = sbr.rel (%p395) target = $region44
    $region43: #{a_call__.19} parent=5 // pred_region
      %s398 = ssub.s32 %s11, 2
      // Predicated region
      $region45: #{a_call__.19} parent=43 // pred_check
        %p399 = pneg %p108
      $region46: #{a_call__.19} parent=43 // pred_check_branch
        %401 = sbr.rel (%p399) target = $region48
      $region47: #{a_call__.19} parent=43 // pred_region
        %s402 = smul.u32 8, %s17
        %p403 = scmp.lt.s32.totalorder %s402, 15
        %s404 = scalar_select %p403, %s402, 15
        %s405 = smul.addr %s404, 8
        %s406 = scalar_lea.vmem %s3, %s405
      $region48: #{a_call__.19} parent=43 // pred_fallthru
        _
      // Predicated region
      $region49: #{a_call__.19} parent=43 // pred_check
        %p407 = pneg %p134
      $region50: #{a_call__.19} parent=43 // pred_check_branch
        %409 = sbr.rel (%p407) target = $region52
      $region51: #{a_call__.19} parent=43 // pred_region
        %p410 = scmp.lt.s32.totalorder %s17, 1
        %s411 = scalar_select %p410, %s17, 1
        %s412 = smul.addr %s411, 8
        %s413 = scalar_lea.vmem %s4, %s412
      $region52: #{a_call__.19} parent=43 // pred_fallthru
        _
    $region44: #{a_call__.19} parent=5 // pred_fallthru
      _
  $region6: #{a_call__.19} parent=0 // loop_footer
    %s15 = sadd.s32 1, %s11
  $region7: #{a_call__.19} parent=0 // loop_footer_branch
    %10 = sbr.rel target = $region3
  $region8: #{a_call__.19} parent=0 // loop_exit
    _

// kernel: a_call__.21
$region0: #{a_call__.21}
  #allocation0 [shape = 'u32[]', space=smem, size = 0x4, offset = 0x4, fixed_abs, tag = 'smem constant byte address 0x4 - core index']
  #allocation1 [shape = 'u32[72,128]{1,0:T(1,128)}', space=vmem, size = 0x9000, scoped, tag = 'internal scratch']
  %s0 = inlined_call_operand.vmem [shape: bf16[512,4], index: 0, kind: input, shape index: {}]
  %s1 = inlined_call_operand.vmem [shape: bf16[4,128], index: 1, kind: input, shape index: {}]
  %s2 = inlined_call_operand.vmem [shape: f32[8,128], index: 2, kind: input, shape index: {}]
  %s3 = inlined_call_operand.vmem [shape: f32[512,128], index: 3, kind: output, shape index: {}]
  %s4 = sld [smem:[#allocation0]]
  $region45: #{a_call__.21} parent=0
    _
  %s6 = ssub.s32 1, %s4
  %s7 = scalar_select 0, %s6, %s4
  loop: start=0, step=1, limit=10
  $region2: #{a_call__.21} parent=0 // loop_pre_header
    _
  $region3: #{a_call__.21} parent=0 // loop_header
    %s9 = sphi 0, %s13
    %p10 = scmp.ge.s32.totalorder %s9, 10
    %s19 = sphi 0, %s21
    %s22 = sphi 0, %s19
    %s23 = sphi 0, %s22
    %s39 = sphi 0, %s23
    %s43 = sphi 0, %s43
    %s45 = sphi 0, %s43
    %s46 = sphi 0, %s45
    %s60 = sphi 0, %s46
    %s64 = sphi 0, %s64
    %s66 = sphi 0, %s64
    %s67 = sphi 0, %s66
    %s81 = sphi 0, %s67
    %s87 = sphi 0, %s89
    %s90 = sphi 0, %s87
    %s91 = sphi 0, %s90
    %s107 = sphi 0, %s91
  $region4: #{a_call__.21} parent=0 // loop_header_branch
    %12 = sbr.rel (%p10) target = $region8
  $region5: #{a_call__.21} parent=0 // loop_body
    %s14 = ssub.s32 %s9, 1
    %s15 = ssub.s32 %s9, 2
    %s16 = sadd.s32 %s9, 1
    %s17 = ssub.s32 %s9, %s16
    %p18 = scmp.eq.s32.totalorder %s17, 0
    %s20 = sadd.s32 %s19, 1
    %s21 = scalar_select %p18, %s19, %s20
    %p24 = pneg %p18
    %p25 = scmp.eq.s32.totalorder %s9, 7
    %p26 = por %p24, %p25
    %p27 = scmp.ne.s32.totalorder %s19, %s22
    %p28 = scmp.eq.s32.totalorder %s9, 0
    %p29 = por %p27, %p28
    %p30 = scmp.ne.s32.totalorder %s19, %s22
    %p31 = scmp.eq.s32.totalorder %s14, 7
    %p32 = por %p30, %p31
    %p33 = scmp.ne.s32.totalorder %s22, %s23
    %p34 = scmp.eq.s32.totalorder %s14, 0
    %p35 = por %p33, %p34
    %p36 = scmp.ne.s32.totalorder %s22, %s23
    %p37 = scmp.eq.s32.totalorder %s15, 7
    %p38 = por %p36, %p37
    %p40 = scmp.ne.s32.totalorder %s23, %s39
    %p41 = scmp.eq.s32.totalorder %s15, 0
    %p42 = por %p40, %p41
    %s44 = sadd.s32 %s43, 1
    %p47 = scmp.eq.s32.totalorder %s9, 7
    %p48 = scmp.ne.s32.totalorder %s43, %s45
    %p49 = scmp.eq.s32.totalorder %s9, 0
    %p50 = por %p48, %p49
    %p51 = scmp.ne.s32.totalorder %s43, %s45
    %p52 = scmp.eq.s32.totalorder %s14, 7
    %p53 = por %p51, %p52
    %p54 = scmp.ne.s32.totalorder %s45, %s46
    %p55 = scmp.eq.s32.totalorder %s14, 0
    %p56 = por %p54, %p55
    %p57 = scmp.ne.s32.totalorder %s45, %s46
    %p58 = scmp.eq.s32.totalorder %s15, 7
    %p59 = por %p57, %p58
    %p61 = scmp.ne.s32.totalorder %s46, %s60
    %p62 = scmp.eq.s32.totalorder %s15, 0
    %p63 = por %p61, %p62
    %s65 = sadd.s32 %s64, 1
    %p68 = scmp.eq.s32.totalorder %s9, 7
    %p69 = scmp.ne.s32.totalorder %s64, %s66
    %p70 = scmp.eq.s32.totalorder %s9, 0
    %p71 = por %p69, %p70
    %p72 = scmp.ne.s32.totalorder %s64, %s66
    %p73 = scmp.eq.s32.totalorder %s14, 7
    %p74 = por %p72, %p73
    %p75 = scmp.ne.s32.totalorder %s66, %s67
    %p76 = scmp.eq.s32.totalorder %s14, 0
    %p77 = por %p75, %p76
    %p78 = scmp.ne.s32.totalorder %s66, %s67
    %p79 = scmp.eq.s32.totalorder %s15, 7
    %p80 = por %p78, %p79
    %p82 = scmp.ne.s32.totalorder %s67, %s81
    %p83 = scmp.eq.s32.totalorder %s15, 0
    %p84 = por %p82, %p83
    %s85 = ssub.s32 %s9, %s16
    %p86 = scmp.eq.s32.totalorder %s85, 0
    %s88 = sadd.s32 %s87, 1
    %s89 = scalar_select %p86, %s87, %s88
    %p92 = pneg %p86
    %p93 = scmp.eq.s32.totalorder %s9, 7
    %p94 = por %p92, %p93
    %p95 = scmp.ne.s32.totalorder %s87, %s90
    %p96 = scmp.eq.s32.totalorder %s9, 0
    %p97 = por %p95, %p96
    %p98 = scmp.ne.s32.totalorder %s87, %s90
    %p99 = scmp.eq.s32.totalorder %s14, 7
    %p100 = por %p98, %p99
    %p101 = scmp.ne.s32.totalorder %s90, %s91
    %p102 = scmp.eq.s32.totalorder %s14, 0
    %p103 = por %p101, %p102
    %p104 = scmp.ne.s32.totalorder %s90, %s91
    %p105 = scmp.eq.s32.totalorder %s15, 7
    %p106 = por %p104, %p105
    %p108 = scmp.ne.s32.totalorder %s91, %s107
    %p109 = scmp.eq.s32.totalorder %s15, 0
    %p110 = por %p108, %p109
    %p111 = scmp.le.s32.totalorder 1, %s9
    %p112 = scmp.lt.s32.totalorder %s9, 9
    %p113 = pnand %p111, %p112
    %p114 = pneg %p113
    // Predicated region
    $region9: #{a_call__.21} parent=5 // pred_check
      _
    $region10: #{a_call__.21} parent=5 // pred_check_branch
      %116 = sbr.rel (%p113) target = $region12
    $region11: #{a_call__.21} parent=5 // pred_region
      %s117 = ssub.s32 %s9, 1
      // Predicated region
      $region13: #{a_call__.21} parent=11 // pred_check
        %p118 = pneg %p56
      $region14: #{a_call__.21} parent=11 // pred_check_branch
        %120 = sbr.rel (%p118) target = $region16
      $region15: #{a_call__.21} parent=11 // pred_region
        _
      $region16: #{a_call__.21} parent=11 // pred_fallthru
        _
      // Predicated region
      $region17: #{a_call__.21} parent=11 // pred_check
        %p121 = pneg %p77
      $region18: #{a_call__.21} parent=11 // pred_check_branch
        %123 = sbr.rel (%p121) target = $region20
      $region19: #{a_call__.21} parent=11 // pred_region
        _
      $region20: #{a_call__.21} parent=11 // pred_fallthru
        _
    $region12: #{a_call__.21} parent=5 // pred_fallthru
      _
    %p124 = scmp.lt.s32.totalorder %s9, 8
    // Predicated region
    $region21: #{a_call__.21} parent=5 // pred_check
      %p125 = pneg %p124
    $region22: #{a_call__.21} parent=5 // pred_check_branch
      %127 = sbr.rel (%p125) target = $region24
    $region23: #{a_call__.21} parent=5 // pred_region
      // Predicated region
      $region25: #{a_call__.21} parent=23 // pred_check
        %p128 = pneg %p29
      $region26: #{a_call__.21} parent=23 // pred_check_branch
        %130 = sbr.rel (%p128) target = $region28
      $region27: #{a_call__.21} parent=23 // pred_region
        %s131 = smul.u32 8, %s9
        %p132 = scmp.lt.s32.totalorder %s131, 63
        %s133 = scalar_select %p132, %s131, 63
        %s134 = smul.addr %s133, 4
        %s135 = scalar_lea.vmem %s0, %s134
        %s136 = smul.u32 8, %s9
      $region28: #{a_call__.21} parent=23 // pred_fallthru
        _
    $region24: #{a_call__.21} parent=5 // pred_fallthru
      _
    %p137 = scmp.le.s32.totalorder 1, %s9
    %p138 = scmp.lt.s32.totalorder %s9, 9
    %p139 = pnand %p137, %p138
    %p140 = pneg %p139
    // Predicated region
    $region29: #{a_call__.21} parent=5 // pred_check
      _
    $region30: #{a_call__.21} parent=5 // pred_check_branch
      %142 = sbr.rel (%p139) target = $region32
    $region31: #{a_call__.21} parent=5 // pred_region
      %s143 = ssub.s32 %s9, 1
      %s144 = smul.u32 8, %s14
      %p145 = scmp.lt.s32.totalorder %s144, 63
      %s146 = scalar_select %p145, %s144, 63
      %s147 = smul.addr %s146, 4
      %s148 = scalar_lea.vmem %s0, %s147
      %p149 = pneg %p35
      %p150 = pneg %p32
      %p151 = pneg %p56
      %p152 = pneg %p53
      %p153 = pneg %p77
      %p154 = pneg %p74
      %p155 = pneg %p103
      %p156 = pneg %p100
      %s157 = smul.u32 8, %s14
      %p158 = scmp.lt.s32.totalorder %s157, 63
      %s159 = scalar_select %p158, %s157, 63
      %s160 = smul.addr %s159, 8
      %s161 = scalar_lea.vmem %s3, %s160
      %s162 = smul.u32 8, %s14
      %p163 = scmp.lt.s32.totalorder %s162, 63
      %s164 = scalar_select %p163, %s162, 63
      %s165 = smul.addr %s164, 4
      %s166 = scalar_lea.vmem %s0, %s165
      %s167 = smul.u32 8, %s14
      %s168 = smul.u32 8, %s14
      %p169 = scmp.lt.s32.totalorder %s168, 63
      %s170 = scalar_select %p169, %s168, 63
      %s171 = smul.addr %s170, 8
      %s172 = scalar_lea.vmem %s3, %s171
      %s173 = smul.u32 8, %s14
      %v175 = vld [vmem:[%s166] sm:$0xf]
      %v176 = vld [vmem:[%s166 + $0x4] sm:$0xf]
      %v177 = vld [vmem:[%s166 + $0x8] sm:$0xf]
      %v178 = vld [vmem:[%s166 + $0xc] sm:$0xf]
      %v179 = vld [vmem:[%s166 + $0x10] sm:$0xf]
      %v180 = vld [vmem:[%s166 + $0x14] sm:$0xf]
      %v181 = vld [vmem:[%s166 + $0x18] sm:$0xf]
      %v182 = vld [vmem:[%s166 + $0x1c] sm:$0xf]
      %v183 = vld [vmem:[%s1] sm:$0x3]
      %v184 = vld [vmem:[%s2] sm:$0xff]
      %v185 = vperm.slane %v184, 0
      %v194 = vunpack.c.l.b16 %v175
      %v195 = vunpack.c.l.b16 %v176
      %v196 = vunpack.c.l.b16 %v177
      %v197 = vunpack.c.l.b16 %v178
      %v198 = vunpack.c.l.b16 %v179
      %v199 = vunpack.c.l.b16 %v180
      %v200 = vunpack.c.l.b16 %v181
      %v201 = vunpack.c.l.b16 %v182
      %v202 = vpack.c.b16 %v195, %v194
      %v203 = vpack.c.b16 %v197, %v196
      %v204 = vpack.c.b16 %v199, %v198
      %v205 = vpack.c.b16 %v201, %v200
      %vm206 = vcmask 31744
      %v208 = vsel %vm206, %v202, 0
      %v211 = vsel %vm206, %v203, 0
      %v214 = vsel %vm206, %v204, 0
      %v217 = vsel %vm206, %v205, 0
      %vm219 = vcmask 1041408
      %v221 = vsel %vm219, %v183, 0
      %223 = vmatpush.bf16.msra.mxu0 0
      %224 = vmatpush.bf16.msra.mxu0 0
      %225 = vmatpush.bf16.msra.mxu0 0
      %226 = vmatpush.bf16.msra.mxu0 0
      %227 = vmatpush.bf16.msra.mxu0 0
      %228 = vmatpush.bf16.msra.mxu0 0
      %229 = vmatpush.bf16.msra.mxu0 0
      %230 = vmatpush.bf16.msra.mxu0 %v221
      %231 = vmatmul.bf16.gmra.mxu0 %v208
      %v232 = vpop.f32.mrf.mxu0
      %v233 = vadd.f32 %v185, %v232
      %v234 = vpop.f32.mrf.mxu0
      %v235 = vadd.f32 %v185, %v234
      %236 = vmatmul.bf16.gmra.mxu0 %v211
      %v237 = vpop.f32.mrf.mxu0
      %v238 = vadd.f32 %v185, %v237
      %v239 = vpop.f32.mrf.mxu0
      %v240 = vadd.f32 %v185, %v239
      %241 = vmatmul.bf16.gmra.mxu0 %v214
      %v242 = vpop.f32.mrf.mxu0
      %v243 = vadd.f32 %v185, %v242
      %v244 = vpop.f32.mrf.mxu0
      %v245 = vadd.f32 %v185, %v244
      %246 = vmatmul.bf16.gmra.mxu0 %v217
      %v247 = vpop.f32.mrf.mxu0
      %v248 = vadd.f32 %v185, %v247
      %v249 = vpop.f32.mrf.mxu0
      %v250 = vadd.f32 %v185, %v249
      %251 = vdwg.mxu0
      %v252 = vtanh.pop %v233
      %v253 = vtanh.pop %v235
      %v254 = vtanh.pop %v238
      %v255 = vtanh.pop %v240
      %v256 = vtanh.pop %v243
      %v257 = vtanh.pop %v245
      %v258 = vtanh.pop %v248
      %v259 = vtanh.pop %v250
      %260 = vst [vmem:[%s172] sm:$0xff] %v252
      %261 = vst [vmem:[%s172 + $0x8] sm:$0xff] %v253
      %262 = vst [vmem:[%s172 + $0x10] sm:$0xff] %v254
      %263 = vst [vmem:[%s172 + $0x18] sm:$0xff] %v255
      %264 = vst [vmem:[%s172 + $0x20] sm:$0xff] %v256
      %265 = vst [vmem:[%s172 + $0x28] sm:$0xff] %v257
      %266 = vst [vmem:[%s172 + $0x30] sm:$0xff] %v258
      %267 = vst [vmem:[%s172 + $0x38] sm:$0xff] %v259
      %s268 = smul.u32 8, %s14
      %p269 = scmp.lt.s32.totalorder %s268, 63
      %s270 = scalar_select %p269, %s268, 63
      %s271 = smul.addr %s270, 8
      %s272 = scalar_lea.vmem %s3, %s271
      // Predicated region
      $region33: #{a_call__.21} parent=31 // pred_check
        %p273 = pneg %p100
      $region34: #{a_call__.21} parent=31 // pred_check_branch
        %275 = sbr.rel (%p273) target = $region36
      $region35: #{a_call__.21} parent=31 // pred_region
        %s276 = smul.u32 8, %s14
      $region36: #{a_call__.21} parent=31 // pred_fallthru
        _
    $region32: #{a_call__.21} parent=5 // pred_fallthru
      _
    %p277 = scmp.le.s32.totalorder 2, %s9
    // Predicated region
    $region37: #{a_call__.21} parent=5 // pred_check
      %p278 = pneg %p277
    $region38: #{a_call__.21} parent=5 // pred_check_branch
      %280 = sbr.rel (%p278) target = $region40
    $region39: #{a_call__.21} parent=5 // pred_region
      %s281 = ssub.s32 %s9, 2
      // Predicated region
      $region41: #{a_call__.21} parent=39 // pred_check
        %p282 = pneg %p106
      $region42: #{a_call__.21} parent=39 // pred_check_branch
        %284 = sbr.rel (%p282) target = $region44
      $region43: #{a_call__.21} parent=39 // pred_region
        %s285 = smul.u32 8, %s15
        %p286 = scmp.lt.s32.totalorder %s285, 63
        %s287 = scalar_select %p286, %s285, 63
        %s288 = smul.addr %s287, 8
        %s289 = scalar_lea.vmem %s3, %s288
      $region44: #{a_call__.21} parent=39 // pred_fallthru
        _
    $region40: #{a_call__.21} parent=5 // pred_fallthru
      _
  $region6: #{a_call__.21} parent=0 // loop_footer
    %s13 = sadd.s32 1, %s9
  $region7: #{a_call__.21} parent=0 // loop_footer_branch
    %8 = sbr.rel target = $region3
  $region8: #{a_call__.21} parent=0 // loop_exit
    _

</llo_original>
